<compile_context>
chip_gen: v6e
topology: v6e:2x2x1
jax: 0.10.0
libtpu: 0.0.40
codegen_flags: <defaults>
</compile_context>

<pallas_src>
import functools

import numpy as np
import jax
import jax.numpy as jnp
from jax.experimental import pallas as pl
from jax.experimental.pallas import tpu as pltpu


def _round_up(x, m):
    return ((x + m - 1) // m) * m


# ------------------------------- Pallas kernel --------------------------------
def _rgcn_kernel(src_ref, dstf_ref, dsto_ref, first_ref, last_ref, cnt_ref, kidx_ref,  # SMEM prefetch
                 a_ref, xsrc_ref, w_ref, xdst_ref, lw_ref, b_ref,                      # VMEM inputs
                 o_ref,                                                                 # VMEM output
                 agg_ref,                                                               # scratch
                 *, fin):
    """Grid = (i: dst row tiles [parallel], r: relations [arbitrary], k: nonzero A tiles [arbitrary])."""
    del src_ref, dstf_ref, dsto_ref, kidx_ref          # consumed by the index_maps only
    i = pl.program_id(0)
    r = pl.program_id(1)
    k = pl.program_id(2)
    n_i = pl.num_programs(0)
    nk = pl.num_programs(2)

    is_first_rel = first_ref[r] == 1                   # first relation of this dst-type group
    is_last_rel = last_ref[r] == 1                     # last relation of this dst-type group
    n_tiles = cnt_ref[r * n_i + i]                     # nonzero (tm, tk) A tiles for this (rel, row tile)

    # -- init: self-loop matmul + bias hoisted into the first step of each dst group
    #    (hidden under the first adjacency-tile DMA instead of serialized in a tail).
    @pl.when(jnp.logical_and(is_first_rel, k == 0))
    def _():
        o_ref[0] = (jnp.dot(xdst_ref[0], lw_ref[...],
                            preferred_element_type=jnp.float32)
                    + b_ref[...])

    # -- zero the per-relation aggregation scratch at the first inner step
    @pl.when(k == 0)
    def _():
        agg_ref[...] = jnp.zeros_like(agg_ref)

    # -- message passing over the NONZERO adjacency tiles only.
    #    bf16 x bf16 -> f32 accumulate on the MXU (A is exact 0/1 in bf16); the ones-column of
    #    Xsrc makes column `fin` of agg the f32-exact in-degree (no XLU row-sum needed).
    @pl.when(k < n_tiles)
    def _():
        agg_ref[...] += jnp.dot(a_ref[0], xsrc_ref[0],
                                preferred_element_type=jnp.float32)

    # -- last inner step of this relation: per-relation weight + right-norm, accumulate into the
    #    VMEM-resident output block (HeteroGraphConv 'sum').
    @pl.when(k == nk - 1)
    def _():
        @pl.when(n_tiles > 0)
        def _():
            agg = agg_ref[...]
            deg = jnp.maximum(agg[:, fin:fin + 1], 1.0)        # clamp(min=1), DGL norm='right'
            h = jnp.dot(agg.astype(jnp.bfloat16), w_ref[0],
                        preferred_element_type=jnp.float32)
            # row scaling commutes with the right matmul; reciprocal lands on the EUP slot
            o_ref[0] += h * pl.reciprocal(deg, approx=True)

        # -- epilogue only at the last relation of this dst group: activation (relu)
        @pl.when(is_last_rel)
        def _():
            o_ref[0] = jnp.maximum(o_ref[0], 0.0)


# ------------------------------- layer wrapper ---------------------------------
def rel_graph_conv_layer(adjs, rels, feats, weight, loop_w, bias, *, tm=512, tk=4096):
    """Full hetero layer: returns dict[dst ntype -> (N_dst, Fout)].

    adjs  : list of dense adjacency (N_dst, N_src) per relation (rows = dst nodes)
    rels  : list of (src_ntype, rel_name, dst_ntype)
    feats : dict[ntype -> (N, Fin)] f32
    weight: (num_rels, Fin, Fout) f32 (already basis-combined)
    loop_w: (Fin, Fout) f32, bias: (Fout,) f32
    tm/tk : target dst-row / src-col tile sizes (multiples of 128)
    """
    ntypes = sorted(feats.keys())
    nt_idx = {n: i for i, n in enumerate(ntypes)}
    num_nt = len(ntypes)
    R = len(rels)

    Fin, Fout = int(loop_w.shape[0]), int(loop_w.shape[1])
    Fin_p = _round_up(Fin + 1, 128)        # +1 column carries the ones (degree) vector
    Fout_p = _round_up(Fout, 128)          # lane-dense output / accumulator

    # ---- tile sizes & node padding --------------------------------------------------
    # Pad N to a multiple of tm (NOT tk) so zero-padding in the A stream is bounded by tm-1;
    # tm_eff and tk_eff are multiples of 128 and both divide N_pad.
    N_req = max(int(f.shape[0]) for f in feats.values())
    tm_eff = min(_round_up(tm, 128), _round_up(N_req, 128))
    N_pad = _round_up(N_req, tm_eff)
    # v7x megacore: ensure the parallel row-tile axis has >= 2 steps when possible
    while N_pad // tm_eff < 2 and tm_eff % 256 == 0:
        tm_eff //= 2
    n_i = N_pad // tm_eff
    best_d = 1
    for d in range(1, n_i + 1):            # tk_eff = largest multiple of tm_eff dividing N_pad, <= tk
        if n_i % d == 0 and tm_eff * d <= max(tk, tm_eff):
            best_d = d
    tk_eff = tm_eff * best_d
    n_kf = N_pad // tk_eff                 # full src-tile count (before sparsity compaction)

    # ---- packed, padded operands (host-side numpy, then bf16 on device) --------------
    Xall_np = np.zeros((num_nt, N_pad, Fin_p), np.float32)
    for t, nt in enumerate(ntypes):
        x = np.asarray(feats[nt], dtype=np.float32)
        Xall_np[t, :x.shape[0], :Fin] = x
    Xall_np[:, :, Fin] = 1.0               # ones column -> in-degree via the same MXU matmul
    Xall = jnp.asarray(Xall_np, dtype=jnp.bfloat16)

    # relations grouped (sorted) by destination node type
    order = sorted(range(R), key=lambda i: nt_idx[rels[i][2]])
    dst_ntypes = sorted({r[2] for r in rels})
    dst_out = {n: i for i, n in enumerate(dst_ntypes)}
    num_dst = len(dst_ntypes)

    A_np = np.zeros((R, N_pad, N_pad), np.float32)
    Wp_np = np.zeros((R, Fin_p, Fout_p), np.float32)
    w_host = np.asarray(weight, dtype=np.float32)
    for j, ri in enumerate(order):
        a = np.asarray(adjs[ri], dtype=np.float32)
        A_np[j, :a.shape[0], :a.shape[1]] = a
        Wp_np[j, :Fin, :Fout] = w_host[ri]
    A = jnp.asarray(A_np, dtype=jnp.bfloat16)       # 0/1 exact in bf16; halves the A HBM stream
    Wp = jnp.asarray(Wp_np, dtype=jnp.bfloat16)

    lw_np = np.zeros((Fin_p, Fout_p), np.float32)
    lw_np[:Fin, :Fout] = np.asarray(loop_w, dtype=np.float32)
    lw = jnp.asarray(lw_np, dtype=jnp.bfloat16)
    bp_np = np.zeros((1, Fout_p), np.float32)
    bp_np[0, :Fout] = np.asarray(bias, dtype=np.float32)
    bp = jnp.asarray(bp_np)                          # bias stays f32 (added after f32 accumulate)

    # ---- sparsity: compacted list of nonzero (tm, tk) adjacency tiles per (rel, row-tile) ----
    nz = A_np.reshape(R, n_i, tm_eff, n_kf, tk_eff).any(axis=(2, 4))      # (R, n_i, n_kf)
    cnt_np = nz.sum(axis=-1).astype(np.int32)                              # (R, n_i)
    n_k = max(1, int(cnt_np.max())) if R > 0 else 1                        # static inner extent
    kidx_np = np.zeros((R, n_i, n_k), np.int32)
    for rj in range(R):
        for ii in range(n_i):
            ks = np.nonzero(nz[rj, ii])[0]
            c = int(ks.size)
            if c:
                kidx_np[rj, ii, :c] = ks
                kidx_np[rj, ii, c:] = ks[-1]   # repeat last index -> pipeline skips the re-fetch

    # scalar-prefetch relation metadata (in dst-sorted order) + sparsity tables
    src_ids = np.asarray([nt_idx[rels[ri][0]] for ri in order], np.int32)
    dstf_ids = np.asarray([nt_idx[rels[ri][2]] for ri in order], np.int32)
    dsto_ids = np.asarray([dst_out[rels[ri][2]] for ri in order], np.int32)
    first_ids = np.asarray([1 if (j == 0 or dsto_ids[j] != dsto_ids[j - 1]) else 0
                            for j in range(R)], np.int32)
    last_ids = np.asarray([1 if (j == R - 1 or dsto_ids[j] != dsto_ids[j + 1]) else 0
                           for j in range(R)], np.int32)

    src_j, dstf_j, dsto_j = jnp.asarray(src_ids), jnp.asarray(dstf_ids), jnp.asarray(dsto_ids)
    first_j, last_j = jnp.asarray(first_ids), jnp.asarray(last_ids)
    cnt_j = jnp.asarray(cnt_np.reshape(-1))
    kidx_j = jnp.asarray(kidx_np.reshape(-1))

    # ---- index maps (grid indices + 7 positional prefetch refs) ----------------------
    def a_idx(i, r, k, src, dstf, dsto, first, last, cnt, kidx):
        return (r, i, kidx[(r * n_i + i) * n_k + k])

    def xs_idx(i, r, k, src, dstf, dsto, first, last, cnt, kidx):
        return (src[r], kidx[(r * n_i + i) * n_k + k], 0)

    def w_idx(i, r, k, *_):
        return (r, 0, 0)

    def xd_idx(i, r, k, src, dstf, dsto, first, last, cnt, kidx):
        return (dstf[r], i, 0)

    def lw_idx(i, r, k, *_):
        return (0, 0)

    def b_idx(i, r, k, *_):
        return (0, 0)

    def o_idx(i, r, k, src, dstf, dsto, first, last, cnt, kidx):
        return (dsto[r], i, 0)

    # ---- VMEM budget (double-buffered) -> compiler limit ------------------------------
    vmem_est = (2 * tm_eff * tk_eff * 2        # A tile (bf16)
                + 2 * tk_eff * Fin_p * 2       # Xsrc tile (bf16)
                + 2 * tm_eff * Fin_p * 2       # Xdst tile (bf16)
                + 4 * Fin_p * Fout_p * 2       # W + loop W (bf16)
                + 2 * tm_eff * Fout_p * 4      # resident output block (f32)
                + tm_eff * Fin_p * 4           # agg scratch (f32)
                + (1 << 20))
    vmem_limit = int(max(vmem_est + (8 << 20), 32 << 20))

    grid_spec = pltpu.PrefetchScalarGridSpec(
        num_scalar_prefetch=7,
        grid=(n_i, R, n_k),
        in_specs=[
            pl.BlockSpec((1, tm_eff, tk_eff), a_idx),     # adjacency tile (nonzero tiles only)
            pl.BlockSpec((1, tk_eff, Fin_p), xs_idx),     # src features by relation's src ntype
            pl.BlockSpec((1, Fin_p, Fout_p), w_idx),      # per-relation weight
            pl.BlockSpec((1, tm_eff, Fin_p), xd_idx),     # dst features (self loop)
            pl.BlockSpec((Fin_p, Fout_p), lw_idx),        # self-loop weight (resident)
            pl.BlockSpec((1, Fout_p), b_idx),             # bias (resident)
        ],
        out_specs=pl.BlockSpec((1, tm_eff, Fout_p), o_idx),
        scratch_shapes=[pltpu.VMEM((tm_eff, Fin_p), jnp.float32)],
    )

    out = pl.pallas_call(
        functools.partial(_rgcn_kernel, fin=Fin),
        out_shape=jax.ShapeDtypeStruct((num_dst, N_pad, Fout_p), jnp.float32),
        grid_spec=grid_spec,
        compiler_params=pltpu.CompilerParams(
            dimension_semantics=("parallel", "arbitrary", "arbitrary"),
            vmem_limit_bytes=vmem_limit),
    )(src_j, dstf_j, dsto_j, first_j, last_j, cnt_j, kidx_j,
      A, Xall, Wp, Xall, lw, bp)

    return {nt: out[dst_out[nt], :feats[nt].shape[0], :Fout] for nt in dst_ntypes}


# ------------------------------ reference (JAX) --------------------------------
def rel_graph_conv_layer_ref(adjs, rels, feats, weight, loop_w, bias):
    out = {}
    for dst in sorted({d for (_, _, d) in rels}):
        acc = feats[dst] @ loop_w + jnp.reshape(bias, (1, -1))
        for i, (src, _, d) in enumerate(rels):
            if d != dst:
                continue
            A = adjs[i].astype(jnp.float32)
            deg = jnp.maximum(jnp.sum(A, axis=-1, keepdims=True), 1.0)
            acc = acc + (A @ feats[src] / deg) @ weight[i]
        out[dst] = jnp.maximum(acc, 0.0)
    return out


# ------------------------------------ main --------------------------------------
if __name__ == "__main__":
    key = jax.random.PRNGKey(0)

    # small deterministic synthetic hetero graph
    N = 64
    in_feat = 32
    out_feat = 32
    rels = [("user", "follows", "user"),
            ("item", "bought_by", "user"),
            ("user", "buys", "item")]
    num_rels = len(rels)
    num_bases = 2          # num_bases < num_rels -> WeightBasis path

    ks = jax.random.split(key, 8)

    def xavier(k, shape, gain):
        fan_in, fan_out = shape[-2], shape[-1]
        bound = gain * (6.0 / (fan_in + fan_out)) ** 0.5
        return jax.random.uniform(k, shape, jnp.float32, -bound, bound)

    relu_gain = 2.0 ** 0.5
    # WeightBasis parameters + basis combination (plain-JAX parameter glue)
    bases = xavier(ks[0], (num_bases, in_feat, out_feat), relu_gain)
    w_comp = xavier(ks[1], (num_rels, num_bases), relu_gain)
    weight = jnp.einsum("rb,bio->rio", w_comp, bases)
    loop_w = xavier(ks[2], (in_feat, out_feat), relu_gain)
    bias = jnp.zeros((out_feat,), jnp.float32)

    feats = {
        "user": jax.random.normal(ks[3], (N, in_feat), jnp.float32),
        "item": jax.random.normal(ks[4], (N, in_feat), jnp.float32),
    }
    adjs = [
        jax.random.bernoulli(ks[5], 0.3, (N, N)).astype(jnp.float32),
        jax.random.bernoulli(ks[6], 0.3, (N, N)).astype(jnp.float32),
        jax.random.bernoulli(ks[7], 0.3, (N, N)).astype(jnp.float32),
    ]

    out = rel_graph_conv_layer(adjs, rels, feats, weight, loop_w, bias)
    out = {k_: jax.block_until_ready(v) for k_, v in out.items()}

    # Reference in f32 math on bf16-rounded operands (the kernel feeds the MXU bf16).
    rnd = lambda a: a.astype(jnp.bfloat16).astype(jnp.float32)
    ref = rel_graph_conv_layer_ref(
        adjs, rels, {k_: rnd(v) for k_, v in feats.items()}, rnd(weight), rnd(loop_w), bias)
    for nt in ref:
        assert out[nt].shape == (N, out_feat), (nt, out[nt].shape)
        err = float(jnp.max(jnp.abs(out[nt] - ref[nt])))
        assert jnp.allclose(out[nt], ref[nt], atol=2e-2, rtol=2e-2), (nt, err)

    print("KERNEL_OK")
</pallas_src>

<mosaic_0001>
module attributes {stable_mosaic.version = 11 : i64} {
  func.func @_rgcn_kernel(%arg0: i32, %arg1: i32, %arg2: i32, %arg3: memref<3xi32, #tpu.memory_space<smem>>, %arg4: memref<3xi32, #tpu.memory_space<smem>>, %arg5: memref<3xi32, #tpu.memory_space<smem>>, %arg6: memref<3xi32, #tpu.memory_space<smem>>, %arg7: memref<3xi32, #tpu.memory_space<smem>>, %arg8: memref<3xi32, #tpu.memory_space<smem>>, %arg9: memref<3xi32, #tpu.memory_space<smem>>, %arg10: memref<1x128x128xbf16, #tpu.memory_space<vmem>>, %arg11: memref<1x128x128xbf16, #tpu.memory_space<vmem>>, %arg12: memref<1x128x128xbf16, #tpu.memory_space<vmem>>, %arg13: memref<1x128x128xbf16, #tpu.memory_space<vmem>>, %arg14: memref<128x128xbf16, #tpu.memory_space<vmem>>, %arg15: memref<1x128xf32, #tpu.memory_space<vmem>>, %arg16: memref<1x128x128xf32, #tpu.memory_space<vmem>>, %arg17: memref<128x128xf32, #tpu.memory_space<vmem>>) attributes {dimension_semantics = [#tpu.dimension_semantics<parallel>, #tpu.dimension_semantics<arbitrary>, #tpu.dimension_semantics<arbitrary>], iteration_bounds = array<i64: 1, 3, 1>, scalar_prefetch = 7 : i64, scratch_operands = 1 : i64, tpu.core_type = #tpu.core_type<tc>, window_params = [{transform_indices = @transform_0, window_bounds = array<i64: 1, 128, 128>}, {transform_indices = @transform_1, window_bounds = array<i64: 1, 128, 128>}, {transform_indices = @transform_2, window_bounds = array<i64: 1, 128, 128>}, {transform_indices = @transform_3, window_bounds = array<i64: 1, 128, 128>}, {pipeline_mode = #tpu.pipeline_mode<synchronous>, transform_indices = @transform_4, window_bounds = array<i64: 128, 128>}, {pipeline_mode = #tpu.pipeline_mode<synchronous>, transform_indices = @transform_5, window_bounds = array<i64: 1, 128>}, {transform_indices = @transform_6, window_bounds = array<i64: 1, 128, 128>}]} {
    %0 = arith.index_cast %arg1 : i32 to index
    %1 = memref.load %arg6[%0] : memref<3xi32, #tpu.memory_space<smem>>
    %c1_i32 = arith.constant 1 : i32
    %2 = arith.cmpi eq, %1, %c1_i32 : i32
    %3 = arith.index_cast %arg1 : i32 to index
    %4 = memref.load %arg7[%3] : memref<3xi32, #tpu.memory_space<smem>>
    %c1_i32_0 = arith.constant 1 : i32
    %5 = arith.cmpi eq, %4, %c1_i32_0 : i32
    %c1_i32_1 = arith.constant 1 : i32
    %6 = arith.muli %arg1, %c1_i32_1 : i32
    %7 = arith.addi %6, %arg0 : i32
    %8 = arith.index_cast %7 : i32 to index
    %9 = memref.load %arg8[%8] : memref<3xi32, #tpu.memory_space<smem>>
    %c0_i32 = arith.constant 0 : i32
    %10 = arith.cmpi eq, %arg2, %c0_i32 : i32
    %11 = arith.andi %2, %10 : i1
    %12 = arith.extui %11 : i1 to i32
    %c0_i32_2 = arith.constant 0 : i32
    %13 = arith.cmpi ne, %12, %c0_i32_2 : i32
    scf.if %13 {
      %c0 = arith.constant 0 : index
      %c0_8 = arith.constant 0 : index
      %c0_9 = arith.constant 0 : index
      %23 = vector.load %arg13[%c0, %c0_8, %c0_9] : memref<1x128x128xbf16, #tpu.memory_space<vmem>>, vector<1x128x128xbf16>
      %24 = vector.shape_cast %23 : vector<1x128x128xbf16> to vector<128x128xbf16>
      %c0_10 = arith.constant 0 : index
      %c0_11 = arith.constant 0 : index
      %25 = vector.load %arg14[%c0_10, %c0_11] : memref<128x128xbf16, #tpu.memory_space<vmem>>, vector<128x128xbf16>
      %cst = arith.constant dense<0.000000e+00> : vector<128x128xf32>
      %26 = tpu.matmul %24, %25, %cst {dimension_numbers = #tpu.dot_dimension_numbers<[1], [0], [0], [1], [0, 0, 1, 1], [], []>} : vector<128x128xbf16>, vector<128x128xbf16>, vector<128x128xf32> -> vector<128x128xf32>
      %c0_12 = arith.constant 0 : index
      %c0_13 = arith.constant 0 : index
      %27 = vector.load %arg15[%c0_12, %c0_13] : memref<1x128xf32, #tpu.memory_space<vmem>>, vector<1x128xf32>
      %28 = vector.broadcast %27 : vector<1x128xf32> to vector<128x128xf32>
      %29 = arith.addf %26, %28 : vector<128x128xf32>
      %c0_14 = arith.constant 0 : index
      %c0_15 = arith.constant 0 : index
      %c0_16 = arith.constant 0 : index
      %30 = vector.load %arg16[%c0_14, %c0_15, %c0_16] : memref<1x128x128xf32, #tpu.memory_space<vmem>>, vector<1x128x128xf32>
      %31 = vector.shape_cast %30 : vector<1x128x128xf32> to vector<128x128xf32>
      %32 = vector.shape_cast %29 : vector<128x128xf32> to vector<1x128x128xf32>
      tpu.vector_store %arg16[%c0_14, %c0_15, %c0_16], %32 {strides = array<i32>} : memref<1x128x128xf32, #tpu.memory_space<vmem>>, vector<1x128x128xf32>,
    } else {
    }
    %c0_i32_3 = arith.constant 0 : i32
    %14 = arith.cmpi eq, %arg2, %c0_i32_3 : i32
    %15 = arith.extui %14 : i1 to i32
    %c0_i32_4 = arith.constant 0 : i32
    %16 = arith.cmpi ne, %15, %c0_i32_4 : i32
    scf.if %16 {
      %cst = arith.constant 0.000000e+00 : f32
      %23 = vector.broadcast %cst : f32 to vector<128x128xf32>
      %c0 = arith.constant 0 : index
      %c0_8 = arith.constant 0 : index
      %24 = vector.load %arg17[%c0, %c0_8] : memref<128x128xf32, #tpu.memory_space<vmem>>, vector<128x128xf32>
      tpu.vector_store %arg17[%c0, %c0_8], %23 {strides = array<i32>} : memref<128x128xf32, #tpu.memory_space<vmem>>, vector<128x128xf32>,
    } else {
    }
    %17 = arith.cmpi slt, %arg2, %9 : i32
    %18 = arith.extui %17 : i1 to i32
    %c0_i32_5 = arith.constant 0 : i32
    %19 = arith.cmpi ne, %18, %c0_i32_5 : i32
    scf.if %19 {
      %c0 = arith.constant 0 : index
      %c0_8 = arith.constant 0 : index
      %23 = vector.load %arg17[%c0, %c0_8] : memref<128x128xf32, #tpu.memory_space<vmem>>, vector<128x128xf32>
      %c0_9 = arith.constant 0 : index
      %c0_10 = arith.constant 0 : index
      %c0_11 = arith.constant 0 : index
      %24 = vector.load %arg10[%c0_9, %c0_10, %c0_11] : memref<1x128x128xbf16, #tpu.memory_space<vmem>>, vector<1x128x128xbf16>
      %25 = vector.shape_cast %24 : vector<1x128x128xbf16> to vector<128x128xbf16>
      %c0_12 = arith.constant 0 : index
      %c0_13 = arith.constant 0 : index
      %c0_14 = arith.constant 0 : index
      %26 = vector.load %arg11[%c0_12, %c0_13, %c0_14] : memref<1x128x128xbf16, #tpu.memory_space<vmem>>, vector<1x128x128xbf16>
      %27 = vector.shape_cast %26 : vector<1x128x128xbf16> to vector<128x128xbf16>
      %cst = arith.constant dense<0.000000e+00> : vector<128x128xf32>
      %28 = tpu.matmul %25, %27, %cst {dimension_numbers = #tpu.dot_dimension_numbers<[1], [0], [0], [1], [0, 0, 1, 1], [], []>} : vector<128x128xbf16>, vector<128x128xbf16>, vector<128x128xf32> -> vector<128x128xf32>
      %29 = arith.addf %23, %28 : vector<128x128xf32>
      %c0_15 = arith.constant 0 : index
      %c0_16 = arith.constant 0 : index
      %30 = vector.load %arg17[%c0_15, %c0_16] : memref<128x128xf32, #tpu.memory_space<vmem>>, vector<128x128xf32>
      tpu.vector_store %arg17[%c0_15, %c0_16], %29 {strides = array<i32>} : memref<128x128xf32, #tpu.memory_space<vmem>>, vector<128x128xf32>,
    } else {
    }
    %c0_i32_6 = arith.constant 0 : i32
    %20 = arith.cmpi eq, %arg2, %c0_i32_6 : i32
    %21 = arith.extui %20 : i1 to i32
    %c0_i32_7 = arith.constant 0 : i32
    %22 = arith.cmpi ne, %21, %c0_i32_7 : i32
    scf.if %22 {
      %c0_i32_8 = arith.constant 0 : i32
      %23 = arith.cmpi sgt, %9, %c0_i32_8 : i32
      %24 = arith.extui %23 : i1 to i32
      %c0_i32_9 = arith.constant 0 : i32
      %25 = arith.cmpi ne, %24, %c0_i32_9 : i32
      scf.if %25 {
        %c0 = arith.constant 0 : index
        %c0_11 = arith.constant 0 : index
        %28 = vector.load %arg17[%c0, %c0_11] : memref<128x128xf32, #tpu.memory_space<vmem>>, vector<128x128xf32>
        %29 = vector.extract_strided_slice %28 {offsets = [0, 32], sizes = [128, 1], strides = [1, 1]} : vector<128x128xf32> to vector<128x1xf32>
        %cst = arith.constant 1.000000e+00 : f32
        %30 = vector.broadcast %cst : f32 to vector<128x1xf32>
        %31 = arith.maximumf %29, %30 : vector<128x1xf32>
        %32 = arith.truncf %28 : vector<128x128xf32> to vector<128x128xbf16>
        %c0_12 = arith.constant 0 : index
        %c0_13 = arith.constant 0 : index
        %c0_14 = arith.constant 0 : index
        %33 = vector.load %arg12[%c0_12, %c0_13, %c0_14] : memref<1x128x128xbf16, #tpu.memory_space<vmem>>, vector<1x128x128xbf16>
        %34 = vector.shape_cast %33 : vector<1x128x128xbf16> to vector<128x128xbf16>
        %cst_15 = arith.constant dense<0.000000e+00> : vector<128x128xf32>
        %35 = tpu.matmul %32, %34, %cst_15 {dimension_numbers = #tpu.dot_dimension_numbers<[1], [0], [0], [1], [0, 0, 1, 1], [], []>} : vector<128x128xbf16>, vector<128x128xbf16>, vector<128x128xf32> -> vector<128x128xf32>
        %c0_16 = arith.constant 0 : index
        %c0_17 = arith.constant 0 : index
        %c0_18 = arith.constant 0 : index
        %36 = vector.load %arg16[%c0_16, %c0_17, %c0_18] : memref<1x128x128xf32, #tpu.memory_space<vmem>>, vector<1x128x128xf32>
        %37 = vector.shape_cast %36 : vector<1x128x128xf32> to vector<128x128xf32>
        %38 = tpu.reciprocal %31 {approx = true} : vector<128x1xf32> -> vector<128x1xf32>
        %39 = vector.broadcast %38 : vector<128x1xf32> to vector<128x128xf32>
        %40 = arith.mulf %35, %39 : vector<128x128xf32>
        %41 = arith.addf %37, %40 : vector<128x128xf32>
        %c0_19 = arith.constant 0 : index
        %c0_20 = arith.constant 0 : index
        %c0_21 = arith.constant 0 : index
        %42 = vector.load %arg16[%c0_19, %c0_20, %c0_21] : memref<1x128x128xf32, #tpu.memory_space<vmem>>, vector<1x128x128xf32>
        %43 = vector.shape_cast %42 : vector<1x128x128xf32> to vector<128x128xf32>
        %44 = vector.shape_cast %41 : vector<128x128xf32> to vector<1x128x128xf32>
        tpu.vector_store %arg16[%c0_19, %c0_20, %c0_21], %44 {strides = array<i32>} : memref<1x128x128xf32, #tpu.memory_space<vmem>>, vector<1x128x128xf32>,
      } else {
      }
      %26 = arith.extui %5 : i1 to i32
      %c0_i32_10 = arith.constant 0 : i32
      %27 = arith.cmpi ne, %26, %c0_i32_10 : i32
      scf.if %27 {
        %c0 = arith.constant 0 : index
        %c0_11 = arith.constant 0 : index
        %c0_12 = arith.constant 0 : index
        %28 = vector.load %arg16[%c0, %c0_11, %c0_12] : memref<1x128x128xf32, #tpu.memory_space<vmem>>, vector<1x128x128xf32>
        %29 = vector.shape_cast %28 : vector<1x128x128xf32> to vector<128x128xf32>
        %cst = arith.constant 0.000000e+00 : f32
        %30 = vector.broadcast %cst : f32 to vector<128x128xf32>
        %31 = arith.maximumf %29, %30 : vector<128x128xf32>
        %c0_13 = arith.constant 0 : index
        %c0_14 = arith.constant 0 : index
        %c0_15 = arith.constant 0 : index
        %32 = vector.load %arg16[%c0_13, %c0_14, %c0_15] : memref<1x128x128xf32, #tpu.memory_space<vmem>>, vector<1x128x128xf32>
        %33 = vector.shape_cast %32 : vector<1x128x128xf32> to vector<128x128xf32>
        %34 = vector.shape_cast %31 : vector<128x128xf32> to vector<1x128x128xf32>
        tpu.vector_store %arg16[%c0_13, %c0_14, %c0_15], %34 {strides = array<i32>} : memref<1x128x128xf32, #tpu.memory_space<vmem>>, vector<1x128x128xf32>,
      } else {
      }
    } else {
    }
    return
  }
  func.func @transform_0(%arg0: i32, %arg1: i32, %arg2: i32, %arg3: memref<3xi32, #tpu.memory_space<smem>>, %arg4: memref<3xi32, #tpu.memory_space<smem>>, %arg5: memref<3xi32, #tpu.memory_space<smem>>, %arg6: memref<3xi32, #tpu.memory_space<smem>>, %arg7: memref<3xi32, #tpu.memory_space<smem>>, %arg8: memref<3xi32, #tpu.memory_space<smem>>, %arg9: memref<3xi32, #tpu.memory_space<smem>>) -> (i32, i32, i32) {
    %c1_i32 = arith.constant 1 : i32
    %0 = arith.muli %arg1, %c1_i32 : i32
    %1 = arith.addi %0, %arg0 : i32
    %c1_i32_0 = arith.constant 1 : i32
    %2 = arith.muli %1, %c1_i32_0 : i32
    %3 = arith.addi %2, %arg2 : i32
    %4 = arith.index_cast %3 : i32 to index
    %5 = memref.load %arg9[%4] : memref<3xi32, #tpu.memory_space<smem>>
    %c0_i32 = arith.constant 0 : i32
    return %arg1, %arg0, %5 : i32, i32, i32
  }
  func.func @transform_1(%arg0: i32, %arg1: i32, %arg2: i32, %arg3: memref<3xi32, #tpu.memory_space<smem>>, %arg4: memref<3xi32, #tpu.memory_space<smem>>, %arg5: memref<3xi32, #tpu.memory_space<smem>>, %arg6: memref<3xi32, #tpu.memory_space<smem>>, %arg7: memref<3xi32, #tpu.memory_space<smem>>, %arg8: memref<3xi32, #tpu.memory_space<smem>>, %arg9: memref<3xi32, #tpu.memory_space<smem>>) -> (i32, i32, i32) {
    %0 = arith.index_cast %arg1 : i32 to index
    %1 = memref.load %arg3[%0] : memref<3xi32, #tpu.memory_space<smem>>
    %c1_i32 = arith.constant 1 : i32
    %2 = arith.muli %arg1, %c1_i32 : i32
    %3 = arith.addi %2, %arg0 : i32
    %c1_i32_0 = arith.constant 1 : i32
    %4 = arith.muli %3, %c1_i32_0 : i32
    %5 = arith.addi %4, %arg2 : i32
    %6 = arith.index_cast %5 : i32 to index
    %7 = memref.load %arg9[%6] : memref<3xi32, #tpu.memory_space<smem>>
    %c0_i32 = arith.constant 0 : i32
    %c0_i32_1 = arith.constant 0 : i32
    return %1, %7, %c0_i32 : i32, i32, i32
  }
  func.func @transform_2(%arg0: i32, %arg1: i32, %arg2: i32, %arg3: memref<3xi32, #tpu.memory_space<smem>>, %arg4: memref<3xi32, #tpu.memory_space<smem>>, %arg5: memref<3xi32, #tpu.memory_space<smem>>, %arg6: memref<3xi32, #tpu.memory_space<smem>>, %arg7: memref<3xi32, #tpu.memory_space<smem>>, %arg8: memref<3xi32, #tpu.memory_space<smem>>, %arg9: memref<3xi32, #tpu.memory_space<smem>>) -> (i32, i32, i32) {
    %c0_i32 = arith.constant 0 : i32
    %c0_i32_0 = arith.constant 0 : i32
    %c0_i32_1 = arith.constant 0 : i32
    return %arg1, %c0_i32, %c0_i32_0 : i32, i32, i32
  }
  func.func @transform_3(%arg0: i32, %arg1: i32, %arg2: i32, %arg3: memref<3xi32, #tpu.memory_space<smem>>, %arg4: memref<3xi32, #tpu.memory_space<smem>>, %arg5: memref<3xi32, #tpu.memory_space<smem>>, %arg6: memref<3xi32, #tpu.memory_space<smem>>, %arg7: memref<3xi32, #tpu.memory_space<smem>>, %arg8: memref<3xi32, #tpu.memory_space<smem>>, %arg9: memref<3xi32, #tpu.memory_space<smem>>) -> (i32, i32, i32) {
    %0 = arith.index_cast %arg1 : i32 to index
    %1 = memref.load %arg4[%0] : memref<3xi32, #tpu.memory_space<smem>>
    %c0_i32 = arith.constant 0 : i32
    %c0_i32_0 = arith.constant 0 : i32
    return %1, %arg0, %c0_i32 : i32, i32, i32
  }
  func.func @transform_4(%arg0: i32, %arg1: i32, %arg2: i32, %arg3: memref<3xi32, #tpu.memory_space<smem>>, %arg4: memref<3xi32, #tpu.memory_space<smem>>, %arg5: memref<3xi32, #tpu.memory_space<smem>>, %arg6: memref<3xi32, #tpu.memory_space<smem>>, %arg7: memref<3xi32, #tpu.memory_space<smem>>, %arg8: memref<3xi32, #tpu.memory_space<smem>>, %arg9: memref<3xi32, #tpu.memory_space<smem>>) -> (i32, i32) {
    %c0_i32 = arith.constant 0 : i32
    %c0_i32_0 = arith.constant 0 : i32
    %c0_i32_1 = arith.constant 0 : i32
    return %c0_i32, %c0_i32_0 : i32, i32
  }
  func.func @transform_5(%arg0: i32, %arg1: i32, %arg2: i32, %arg3: memref<3xi32, #tpu.memory_space<smem>>, %arg4: memref<3xi32, #tpu.memory_space<smem>>, %arg5: memref<3xi32, #tpu.memory_space<smem>>, %arg6: memref<3xi32, #tpu.memory_space<smem>>, %arg7: memref<3xi32, #tpu.memory_space<smem>>, %arg8: memref<3xi32, #tpu.memory_space<smem>>, %arg9: memref<3xi32, #tpu.memory_space<smem>>) -> (i32, i32) {
    %c0_i32 = arith.constant 0 : i32
    %c0_i32_0 = arith.constant 0 : i32
    %c0_i32_1 = arith.constant 0 : i32
    return %c0_i32, %c0_i32_0 : i32, i32
  }
  func.func @transform_6(%arg0: i32, %arg1: i32, %arg2: i32, %arg3: memref<3xi32, #tpu.memory_space<smem>>, %arg4: memref<3xi32, #tpu.memory_space<smem>>, %arg5: memref<3xi32, #tpu.memory_space<smem>>, %arg6: memref<3xi32, #tpu.memory_space<smem>>, %arg7: memref<3xi32, #tpu.memory_space<smem>>, %arg8: memref<3xi32, #tpu.memory_space<smem>>, %arg9: memref<3xi32, #tpu.memory_space<smem>>) -> (i32, i32, i32) {
    %0 = arith.index_cast %arg1 : i32 to index
    %1 = memref.load %arg5[%0] : memref<3xi32, #tpu.memory_space<smem>>
    %c0_i32 = arith.constant 0 : i32
    %c0_i32_0 = arith.constant 0 : i32
    return %1, %arg0, %c0_i32 : i32, i32, i32
  }
}

</mosaic_0001>

<llo_original>
// kernel: tpu_custom_call.1
$region0: #{tpu_custom_call.1}
  #allocation0 [shape = 'u32[]', space=smem, size = 0x4, offset = 0x4, fixed_abs, tag = 'smem constant byte address 0x4 - core index']
  #allocation1 [shape = 'u32[144,128]{1,0:T(1,128)}', space=vmem, size = 0x12000, scoped, tag = 'internal scratch']
  #allocation2 [shape = 'f32[128,128]{1,0:T(8,128)}', space=vmem, size = 0x10000, scoped, tag = 'scratch operand']
  #allocation3 [shape = 's32[1]{0}', space=sflag, size = 0x4, scoped, tag = 'scoped memory for tpu_custom_call.1']
  #allocation4 [shape = 'u8[512]{0}', space=smem, size = 0x200, scoped, tag = 'prefetched SMEM operand 0']
  #allocation5 [shape = 'u8[512]{0}', space=smem, size = 0x200, scoped, tag = 'prefetched SMEM operand 1']
  #allocation6 [shape = 'u8[512]{0}', space=smem, size = 0x200, scoped, tag = 'prefetched SMEM operand 2']
  #allocation7 [shape = 'u8[512]{0}', space=smem, size = 0x200, scoped, tag = 'prefetched SMEM operand 3']
  #allocation8 [shape = 'u8[512]{0}', space=smem, size = 0x200, scoped, tag = 'prefetched SMEM operand 4']
  #allocation9 [shape = 'u8[512]{0}', space=smem, size = 0x200, scoped, tag = 'prefetched SMEM operand 5']
  #allocation10 [shape = 'u8[512]{0}', space=smem, size = 0x200, scoped, tag = 'prefetched SMEM operand 6']
  %s0 = inlined_call_operand.hbm [shape: s32[3], index: 0, kind: input, shape index: {}]
  %s1 = inlined_call_operand.vmem [shape: s32[3], index: 1, kind: input, shape index: {}]
  %s2 = inlined_call_operand.vmem [shape: s32[3], index: 2, kind: input, shape index: {}]
  %s3 = inlined_call_operand.vmem [shape: s32[3], index: 3, kind: input, shape index: {}]
  %s4 = inlined_call_operand.vmem [shape: s32[3], index: 4, kind: input, shape index: {}]
  %s5 = inlined_call_operand.vmem [shape: s32[3], index: 5, kind: input, shape index: {}]
  %s6 = inlined_call_operand.vmem [shape: s32[3], index: 6, kind: input, shape index: {}]
  %s7 = inlined_call_operand.hbm [shape: bf16[3,128,128], index: 7, kind: input, shape index: {}]
  %s8 = inlined_call_operand.hbm [shape: bf16[2,128,128], index: 8, kind: input, shape index: {}]
  %s9 = inlined_call_operand.hbm [shape: bf16[3,128,128], index: 9, kind: input, shape index: {}]
  %s10 = inlined_call_operand.hbm [shape: bf16[2,128,128], index: 10, kind: input, shape index: {}]
  %s11 = inlined_call_operand.hbm [shape: bf16[128,128], index: 11, kind: input, shape index: {}]
  %s12 = inlined_call_operand.vmem [shape: f32[1,128], index: 12, kind: input, shape index: {}]
  %s13 = inlined_call_operand.hbm [shape: f32[2,128,128], index: 13, kind: output, shape index: {}]
  %s14 = sld [smem:[#allocation0]]
  $region101: #{tpu_custom_call.1} parent=0
    _
  %s16 = ssub.s32 1, %s14
  %s17 = scalar_select 0, %s16, %s14
  %19 = dma.hbm_to_smem %s0, 16, [#allocation4], [#allocation3]
  %s20 = sshll.u32 %s1, 4
  %s21 = int_to_ptr.vmem [resolvable:$true] %s20
  %23 = dma.vmem_to_smem %s21, 16, [#allocation5], [#allocation3]
  %s24 = sshll.u32 %s2, 4
  %s25 = int_to_ptr.vmem [resolvable:$true] %s24
  %27 = dma.vmem_to_smem %s25, 16, [#allocation6], [#allocation3]
  %s28 = sshll.u32 %s3, 4
  %s29 = int_to_ptr.vmem [resolvable:$true] %s28
  %31 = dma.vmem_to_smem %s29, 16, [#allocation7], [#allocation3]
  %s32 = sshll.u32 %s4, 4
  %s33 = int_to_ptr.vmem [resolvable:$true] %s32
  %35 = dma.vmem_to_smem %s33, 16, [#allocation8], [#allocation3]
  %s36 = sshll.u32 %s5, 4
  %s37 = int_to_ptr.vmem [resolvable:$true] %s36
  %39 = dma.vmem_to_smem %s37, 16, [#allocation9], [#allocation3]
  %s40 = sshll.u32 %s6, 4
  %s41 = int_to_ptr.vmem [resolvable:$true] %s40
  %43 = dma.vmem_to_smem %s41, 16, [#allocation10], [#allocation3]
  %44 = dma.done [#allocation3], 112
  %45 = sfence
  $region1: #{tpu_custom_call.1} parent=0
    #allocation11 [shape = 'u8[65536]{0}', space=vmem, size = 0x10000, scoped, tag = 'input window, operand 7']
    #allocation12 [shape = 's32[2]{0}', space=sflag, size = 0x8, scoped, tag = 'scoped memory for tpu_custom_call.1']
    #allocation13 [shape = 's32[2]{0}', space=sflag, size = 0x8, scoped, tag = 'scoped memory for tpu_custom_call.1']
    #allocation14 [shape = 'u8[65536]{0}', space=vmem, size = 0x10000, scoped, tag = 'input window, operand 8']
    #allocation15 [shape = 's32[2]{0}', space=sflag, size = 0x8, scoped, tag = 'scoped memory for tpu_custom_call.1']
    #allocation16 [shape = 'u8[65536]{0}', space=vmem, size = 0x10000, scoped, tag = 'input window, operand 9']
    #allocation17 [shape = 'u8[65536]{0}', space=vmem, size = 0x10000, scoped, tag = 'input window, operand 10']
    #allocation18 [shape = 's32[2]{0}', space=sflag, size = 0x8, scoped, tag = 'scoped memory for tpu_custom_call.1']
    #allocation19 [shape = 'u8[32768]{0}', space=vmem, size = 0x8000, scoped, tag = 'input window, operand 11, single buffered']
    #allocation20 [shape = 'u8[131072]{0}', space=vmem, size = 0x20000, scoped, tag = 'output window, operand 0']
    %46 = vsyncpa [#allocation12], 0
    %s47 = scalar_lea.sflag [#allocation12], 1
    %48 = vsyncpa %s47, 0
    %49 = vsyncpa [#allocation15], 0
    %s50 = scalar_lea.sflag [#allocation15], 1
    %51 = vsyncpa %s50, 0
    %52 = vsyncpa [#allocation18], 0
    %s53 = scalar_lea.sflag [#allocation18], 1
    %54 = vsyncpa %s53, 0
    %55 = vsyncpa [#allocation13], 0
    %s56 = scalar_lea.sflag [#allocation13], 1
    %57 = vsyncpa %s56, 0
    loop: start=0, step=1, limit=5
    $region2: #{tpu_custom_call.1} parent=1 // loop_pre_header
      _
    $region3: #{tpu_custom_call.1} parent=1 // loop_header
      %s59 = sphi 0, %s63
      %p60 = scmp.ge.s32.totalorder %s59, 5
      %s66 = sphi 0, %s85
      %s67 = sphi 0, %s81
      %s68 = sphi 0, %s77
      %s69 = sphi 0, %s66
      %s70 = sphi 0, %s67
      %s71 = sphi 0, %s68
      %s72 = sphi 0, %s69
      %s73 = sphi 0, %s70
      %s74 = sphi 0, %s71
      %s98 = sphi 0, %s100
      %s101 = sphi 0, %s98
      %s102 = sphi 0, %s101
      %s118 = sphi 0, %s102
      %s134 = sphi 0, %s136
      %s137 = sphi 0, %s134
      %s138 = sphi 0, %s137
      %s154 = sphi 0, %s138
      %s160 = sphi 0, %s162
      %s163 = sphi 0, %s160
      %s164 = sphi 0, %s163
      %s180 = sphi 0, %s164
      %s190 = sphi 0, %s192
      %s193 = sphi 0, %s190
      %s194 = sphi 0, %s193
      %s210 = sphi 0, %s194
      %s214 = sphi 0, %s214
      %s216 = sphi 0, %s214
      %s217 = sphi 0, %s216
      %s231 = sphi 0, %s217
      %s235 = sphi 0, %s235
      %s237 = sphi 0, %s235
      %s238 = sphi 0, %s237
      %s252 = sphi 0, %s238
      %s262 = sphi 0, %s264
      %s265 = sphi 0, %s262
      %s266 = sphi 0, %s265
      %s282 = sphi 0, %s266
    $region4: #{tpu_custom_call.1} parent=1 // loop_header_branch
      %62 = sbr.rel (%p60) target = $region8
    $region5: #{tpu_custom_call.1} parent=1 // loop_body
      %s64 = ssub.s32 %s59, 1
      %s65 = ssub.s32 %s59, 2
      %s75 = sadd.s32 1, %s68
      %p76 = scmp.ge.s32.totalorder %s75, 1
      %s77 = scalar_select %p76, 0, %s75
      %s78 = sadd.s32 1, %s67
      %s79 = scalar_select %p76, %s78, %s67
      %p80 = scmp.ge.s32.totalorder %s79, 3
      %s81 = scalar_select %p80, 0, %s79
      %s82 = sadd.s32 1, %s66
      %s83 = scalar_select %p80, %s82, %s66
      %p84 = scmp.ge.s32.totalorder %s83, 1
      %s85 = scalar_select %p84, 0, %s83
      %s86 = sadd.s32 %s67, %s66
      %s87 = sadd.s32 %s86, %s68
      %s88 = sld [smem:[#allocation10 + %s87]]
      %s89 = sadd.s32 %s81, %s85
      %s90 = sadd.s32 %s89, %s77
      %s91 = sld [smem:[#allocation10 + %s90]]
      %s92 = ssub.s32 %s67, %s81
      %s93 = ssub.s32 %s66, %s85
      %s94 = sor.u32 %s92, %s93
      %s95 = ssub.s32 %s88, %s91
      %s96 = sor.u32 %s94, %s95
      %p97 = scmp.eq.s32.totalorder %s96, 0
      %s99 = sadd.s32 %s98, 1
      %s100 = scalar_select %p97, %s98, %s99
      %p103 = pneg %p97
      %p104 = scmp.eq.s32.totalorder %s59, 2
      %p105 = por %p103, %p104
      %p106 = scmp.ne.s32.totalorder %s98, %s101
      %p107 = scmp.eq.s32.totalorder %s59, 0
      %p108 = por %p106, %p107
      %p109 = scmp.ne.s32.totalorder %s98, %s101
      %p110 = scmp.eq.s32.totalorder %s64, 2
      %p111 = por %p109, %p110
      %p112 = scmp.ne.s32.totalorder %s101, %s102
      %p113 = scmp.eq.s32.totalorder %s64, 0
      %p114 = por %p112, %p113
      %p115 = scmp.ne.s32.totalorder %s101, %s102
      %p116 = scmp.eq.s32.totalorder %s65, 2
      %p117 = por %p115, %p116
      %p119 = scmp.ne.s32.totalorder %s102, %s118
      %p120 = scmp.eq.s32.totalorder %s65, 0
      %p121 = por %p119, %p120
      %s122 = sld [smem:[#allocation4 + %s67]]
      %s123 = sadd.s32 %s67, %s66
      %s124 = sadd.s32 %s123, %s68
      %s125 = sld [smem:[#allocation10 + %s124]]
      %s126 = sld [smem:[#allocation4 + %s81]]
      %s127 = sadd.s32 %s81, %s85
      %s128 = sadd.s32 %s127, %s77
      %s129 = sld [smem:[#allocation10 + %s128]]
      %s130 = ssub.s32 %s122, %s126
      %s131 = ssub.s32 %s125, %s129
      %s132 = sor.u32 %s130, %s131
      %p133 = scmp.eq.s32.totalorder %s132, 0
      %s135 = sadd.s32 %s134, 1
      %s136 = scalar_select %p133, %s134, %s135
      %p139 = pneg %p133
      %p140 = scmp.eq.s32.totalorder %s59, 2
      %p141 = por %p139, %p140
      %p142 = scmp.ne.s32.totalorder %s134, %s137
      %p143 = scmp.eq.s32.totalorder %s59, 0
      %p144 = por %p142, %p143
      %p145 = scmp.ne.s32.totalorder %s134, %s137
      %p146 = scmp.eq.s32.totalorder %s64, 2
      %p147 = por %p145, %p146
      %p148 = scmp.ne.s32.totalorder %s137, %s138
      %p149 = scmp.eq.s32.totalorder %s64, 0
      %p150 = por %p148, %p149
      %p151 = scmp.ne.s32.totalorder %s137, %s138
      %p152 = scmp.eq.s32.totalorder %s65, 2
      %p153 = por %p151, %p152
      %p155 = scmp.ne.s32.totalorder %s138, %s154
      %p156 = scmp.eq.s32.totalorder %s65, 0
      %p157 = por %p155, %p156
      %s158 = ssub.s32 %s67, %s81
      %p159 = scmp.eq.s32.totalorder %s158, 0
      %s161 = sadd.s32 %s160, 1
      %s162 = scalar_select %p159, %s160, %s161
      %p165 = pneg %p159
      %p166 = scmp.eq.s32.totalorder %s59, 2
      %p167 = por %p165, %p166
      %p168 = scmp.ne.s32.totalorder %s160, %s163
      %p169 = scmp.eq.s32.totalorder %s59, 0
      %p170 = por %p168, %p169
      %p171 = scmp.ne.s32.totalorder %s160, %s163
      %p172 = scmp.eq.s32.totalorder %s64, 2
      %p173 = por %p171, %p172
      %p174 = scmp.ne.s32.totalorder %s163, %s164
      %p175 = scmp.eq.s32.totalorder %s64, 0
      %p176 = por %p174, %p175
      %p177 = scmp.ne.s32.totalorder %s163, %s164
      %p178 = scmp.eq.s32.totalorder %s65, 2
      %p179 = por %p177, %p178
      %p181 = scmp.ne.s32.totalorder %s164, %s180
      %p182 = scmp.eq.s32.totalorder %s65, 0
      %p183 = por %p181, %p182
      %s184 = sld [smem:[#allocation5 + %s67]]
      %s185 = sld [smem:[#allocation5 + %s81]]
      %s186 = ssub.s32 %s184, %s185
      %s187 = ssub.s32 %s66, %s85
      %s188 = sor.u32 %s186, %s187
      %p189 = scmp.eq.s32.totalorder %s188, 0
      %s191 = sadd.s32 %s190, 1
      %s192 = scalar_select %p189, %s190, %s191
      %p195 = pneg %p189
      %p196 = scmp.eq.s32.totalorder %s59, 2
      %p197 = por %p195, %p196
      %p198 = scmp.ne.s32.totalorder %s190, %s193
      %p199 = scmp.eq.s32.totalorder %s59, 0
      %p200 = por %p198, %p199
      %p201 = scmp.ne.s32.totalorder %s190, %s193
      %p202 = scmp.eq.s32.totalorder %s64, 2
      %p203 = por %p201, %p202
      %p204 = scmp.ne.s32.totalorder %s193, %s194
      %p205 = scmp.eq.s32.totalorder %s64, 0
      %p206 = por %p204, %p205
      %p207 = scmp.ne.s32.totalorder %s193, %s194
      %p208 = scmp.eq.s32.totalorder %s65, 2
      %p209 = por %p207, %p208
      %p211 = scmp.ne.s32.totalorder %s194, %s210
      %p212 = scmp.eq.s32.totalorder %s65, 0
      %p213 = por %p211, %p212
      %s215 = sadd.s32 %s214, 1
      %p218 = scmp.eq.s32.totalorder %s59, 2
      %p219 = scmp.ne.s32.totalorder %s214, %s216
      %p220 = scmp.eq.s32.totalorder %s59, 0
      %p221 = por %p219, %p220
      %p222 = scmp.ne.s32.totalorder %s214, %s216
      %p223 = scmp.eq.s32.totalorder %s64, 2
      %p224 = por %p222, %p223
      %p225 = scmp.ne.s32.totalorder %s216, %s217
      %p226 = scmp.eq.s32.totalorder %s64, 0
      %p227 = por %p225, %p226
      %p228 = scmp.ne.s32.totalorder %s216, %s217
      %p229 = scmp.eq.s32.totalorder %s65, 2
      %p230 = por %p228, %p229
      %p232 = scmp.ne.s32.totalorder %s217, %s231
      %p233 = scmp.eq.s32.totalorder %s65, 0
      %p234 = por %p232, %p233
      %s236 = sadd.s32 %s235, 1
      %p239 = scmp.eq.s32.totalorder %s59, 2
      %p240 = scmp.ne.s32.totalorder %s235, %s237
      %p241 = scmp.eq.s32.totalorder %s59, 0
      %p242 = por %p240, %p241
      %p243 = scmp.ne.s32.totalorder %s235, %s237
      %p244 = scmp.eq.s32.totalorder %s64, 2
      %p245 = por %p243, %p244
      %p246 = scmp.ne.s32.totalorder %s237, %s238
      %p247 = scmp.eq.s32.totalorder %s64, 0
      %p248 = por %p246, %p247
      %p249 = scmp.ne.s32.totalorder %s237, %s238
      %p250 = scmp.eq.s32.totalorder %s65, 2
      %p251 = por %p249, %p250
      %p253 = scmp.ne.s32.totalorder %s238, %s252
      %p254 = scmp.eq.s32.totalorder %s65, 0
      %p255 = por %p253, %p254
      %s256 = sld [smem:[#allocation6 + %s67]]
      %s257 = sld [smem:[#allocation6 + %s81]]
      %s258 = ssub.s32 %s256, %s257
      %s259 = ssub.s32 %s66, %s85
      %s260 = sor.u32 %s258, %s259
      %p261 = scmp.eq.s32.totalorder %s260, 0
      %s263 = sadd.s32 %s262, 1
      %s264 = scalar_select %p261, %s262, %s263
      %p267 = pneg %p261
      %p268 = scmp.eq.s32.totalorder %s59, 2
      %p269 = por %p267, %p268
      %p270 = scmp.ne.s32.totalorder %s262, %s265
      %p271 = scmp.eq.s32.totalorder %s59, 0
      %p272 = por %p270, %p271
      %p273 = scmp.ne.s32.totalorder %s262, %s265
      %p274 = scmp.eq.s32.totalorder %s64, 2
      %p275 = por %p273, %p274
      %p276 = scmp.ne.s32.totalorder %s265, %s266
      %p277 = scmp.eq.s32.totalorder %s64, 0
      %p278 = por %p276, %p277
      %p279 = scmp.ne.s32.totalorder %s265, %s266
      %p280 = scmp.eq.s32.totalorder %s65, 2
      %p281 = por %p279, %p280
      %p283 = scmp.ne.s32.totalorder %s266, %s282
      %p284 = scmp.eq.s32.totalorder %s65, 0
      %p285 = por %p283, %p284
      %p286 = scmp.le.s32.totalorder 1, %s59
      %p287 = scmp.lt.s32.totalorder %s59, 4
      %p288 = pnand %p286, %p287
      %p289 = pneg %p288
      // Predicated region
      $region9: #{tpu_custom_call.1} parent=5 // pred_check
        _
      $region10: #{tpu_custom_call.1} parent=5 // pred_check_branch
        %291 = sbr.rel (%p288) target = $region12
      $region11: #{tpu_custom_call.1} parent=5 // pred_region
        %s292 = ssub.s32 %s59, 1
        // Predicated region
        $region13: #{tpu_custom_call.1} parent=11 // pred_check
          %p293 = pneg %p227
        $region14: #{tpu_custom_call.1} parent=11 // pred_check_branch
          %295 = sbr.rel (%p293) target = $region16
        $region15: #{tpu_custom_call.1} parent=11 // pred_region
          %s297 = ssub.s32 1024, 1024
          %298 = vsyncadd [#allocation18], %s297
          %s299 = sshll.u32 [#allocation19], 4
          %s300 = int_to_ptr.vmem [resolvable:$true] %s299
          %305 = dma.hbm_to_vmem [thread:$0]  %s11, 1024, %s300, [#allocation18], 64, 64, 4
        $region16: #{tpu_custom_call.1} parent=11 // pred_fallthru
          _
        // Predicated region
        $region17: #{tpu_custom_call.1} parent=11 // pred_check
          %p306 = pneg %p248
        $region18: #{tpu_custom_call.1} parent=11 // pred_check_branch
          %308 = sbr.rel (%p306) target = $region20
        $region19: #{tpu_custom_call.1} parent=11 // pred_region
          _
        $region20: #{tpu_custom_call.1} parent=11 // pred_fallthru
          _
      $region12: #{tpu_custom_call.1} parent=5 // pred_fallthru
        _
      %p309 = scmp.lt.s32.totalorder %s59, 3
      // Predicated region
      $region21: #{tpu_custom_call.1} parent=5 // pred_check
        %p310 = pneg %p309
      $region22: #{tpu_custom_call.1} parent=5 // pred_check_branch
        %312 = sbr.rel (%p310) target = $region24
      $region23: #{tpu_custom_call.1} parent=5 // pred_region
        // Predicated region
        $region25: #{tpu_custom_call.1} parent=23 // pred_check
          %p313 = pneg %p108
        $region26: #{tpu_custom_call.1} parent=23 // pred_check_branch
          %315 = sbr.rel (%p313) target = $region28
        $region27: #{tpu_custom_call.1} parent=23 // pred_region
          %s316 = sand.u32 %s98, 1
          %s317 = scalar_lea.sflag [#allocation12], %s316
          %s318 = sand.u32 %s98, 1
          %s319 = smul.addr %s318, 64
          %s320 = scalar_lea.vmem [#allocation11], %s319
          %s321 = sadd.s32 %s67, %s66
          %s322 = sadd.s32 %s321, %s68
          %s323 = sld [smem:[#allocation10 + %s322]]
          %s324 = smul.u32 16, %s66
          %s326 = ssub.s32 1024, 1024
          %327 = vsyncadd %s317, %s326
          %s328 = sadd.s32 %s323, %s324
          %s329 = smul.addr %s67, 16
          %s330 = sadd.s32 %s328, %s329
          %s331 = smul.addr %s330, 64
          %s332 = scalar_lea.hbm %s7, %s331
          %s333 = sshll.u32 %s320, 4
          %s334 = int_to_ptr.vmem [resolvable:$true] %s333
          %339 = dma.hbm_to_vmem [thread:$0]  %s332, 1024, %s334, %s317, 64, 64, 4
        $region28: #{tpu_custom_call.1} parent=23 // pred_fallthru
          _
        // Predicated region
        $region29: #{tpu_custom_call.1} parent=23 // pred_check
          %p340 = pneg %p144
        $region30: #{tpu_custom_call.1} parent=23 // pred_check_branch
          %342 = sbr.rel (%p340) target = $region32
        $region31: #{tpu_custom_call.1} parent=23 // pred_region
          %s343 = sand.u32 %s59, 1
          %s344 = scalar_lea.sflag [#allocation15], %s343
          %s345 = sand.u32 %s134, 1
          %s346 = smul.addr %s345, 64
          %s347 = scalar_lea.vmem [#allocation14], %s346
          %s348 = sld [smem:[#allocation4 + %s67]]
          %s349 = sadd.s32 %s67, %s66
          %s350 = sadd.s32 %s349, %s68
          %s351 = sld [smem:[#allocation10 + %s350]]
          %s352 = smul.u32 16, %s351
          %s354 = ssub.s32 1024, 1024
          %355 = vsyncadd %s344, %s354
          %s356 = smul.addr %s348, 16
          %s357 = sadd.s32 %s352, %s356
          %s358 = smul.addr %s357, 64
          %s359 = scalar_lea.hbm %s8, %s358
          %s360 = sshll.u32 %s347, 4
          %s361 = int_to_ptr.vmem [resolvable:$true] %s360
          %366 = dma.hbm_to_vmem [thread:$0]  %s359, 1024, %s361, %s344, 64, 64, 4
        $region32: #{tpu_custom_call.1} parent=23 // pred_fallthru
          _
        // Predicated region
        $region33: #{tpu_custom_call.1} parent=23 // pred_check
          %p367 = pneg %p170
        $region34: #{tpu_custom_call.1} parent=23 // pred_check_branch
          %369 = sbr.rel (%p367) target = $region36
        $region35: #{tpu_custom_call.1} parent=23 // pred_region
          %s370 = sand.u32 %s59, 1
          %s371 = scalar_lea.sflag [#allocation15], %s370
          %s372 = sand.u32 %s160, 1
          %s373 = smul.addr %s372, 64
          %s374 = scalar_lea.vmem [#allocation16], %s373
          %s376 = ssub.s32 1024, 1024
          %377 = vsyncadd %s371, %s376
          %s378 = smul.addr %s67, 16
          %s379 = smul.addr %s378, 64
          %s380 = scalar_lea.hbm %s9, %s379
          %s381 = sshll.u32 %s374, 4
          %s382 = int_to_ptr.vmem [resolvable:$true] %s381
          %387 = dma.hbm_to_vmem [thread:$0]  %s380, 1024, %s382, %s371, 64, 64, 4
        $region36: #{tpu_custom_call.1} parent=23 // pred_fallthru
          _
        // Predicated region
        $region37: #{tpu_custom_call.1} parent=23 // pred_check
          %p388 = pneg %p200
        $region38: #{tpu_custom_call.1} parent=23 // pred_check_branch
          %390 = sbr.rel (%p388) target = $region40
        $region39: #{tpu_custom_call.1} parent=23 // pred_region
          %s391 = sand.u32 %s59, 1
          %s392 = scalar_lea.sflag [#allocation18], %s391
          %s393 = sand.u32 %s190, 1
          %s394 = smul.addr %s393, 64
          %s395 = scalar_lea.vmem [#allocation17], %s394
          %s396 = sld [smem:[#allocation5 + %s67]]
          %s397 = smul.u32 16, %s66
          %s399 = ssub.s32 1024, 1024
          %400 = vsyncadd %s392, %s399
          %s401 = smul.addr %s396, 16
          %s402 = sadd.s32 %s397, %s401
          %s403 = smul.addr %s402, 64
          %s404 = scalar_lea.hbm %s10, %s403
          %s405 = sshll.u32 %s395, 4
          %s406 = int_to_ptr.vmem [resolvable:$true] %s405
          %411 = dma.hbm_to_vmem [thread:$0]  %s404, 1024, %s406, %s392, 64, 64, 4
        $region40: #{tpu_custom_call.1} parent=23 // pred_fallthru
          _
      $region24: #{tpu_custom_call.1} parent=5 // pred_fallthru
        _
      %p412 = scmp.le.s32.totalorder 1, %s59
      %p413 = scmp.lt.s32.totalorder %s59, 4
      %p414 = pnand %p412, %p413
      %p415 = pneg %p414
      // Predicated region
      $region41: #{tpu_custom_call.1} parent=5 // pred_check
        _
      $region42: #{tpu_custom_call.1} parent=5 // pred_check_branch
        %417 = sbr.rel (%p414) target = $region44
      $region43: #{tpu_custom_call.1} parent=5 // pred_region
        %s418 = ssub.s32 %s59, 1
        %s419 = sand.u32 %s101, 1
        %s420 = scalar_lea.sflag [#allocation12], %s419
        %s421 = sand.u32 %s101, 1
        %s422 = smul.addr %s421, 64
        %s423 = scalar_lea.vmem [#allocation11], %s422
        // Predicated region
        $region45: #{tpu_custom_call.1} parent=43 // pred_check
          %p424 = pneg %p114
        $region46: #{tpu_custom_call.1} parent=43 // pred_check_branch
          %426 = sbr.rel (%p424) target = $region48
        $region47: #{tpu_custom_call.1} parent=43 // pred_region
          %427 = dma.done %s420, 1024
        $region48: #{tpu_custom_call.1} parent=43 // pred_fallthru
          _
        %s428 = sand.u32 %s64, 1
        %s429 = scalar_lea.sflag [#allocation15], %s428
        %s430 = sand.u32 %s137, 1
        %s431 = smul.addr %s430, 64
        %s432 = scalar_lea.vmem [#allocation14], %s431
        // Predicated region
        $region49: #{tpu_custom_call.1} parent=43 // pred_check
          %p433 = pneg %p150
        $region50: #{tpu_custom_call.1} parent=43 // pred_check_branch
          %435 = sbr.rel (%p433) target = $region52
        $region51: #{tpu_custom_call.1} parent=43 // pred_region
          %436 = dma.done %s429, 1024
        $region52: #{tpu_custom_call.1} parent=43 // pred_fallthru
          _
        %s437 = sand.u32 %s64, 1
        %s438 = scalar_lea.sflag [#allocation15], %s437
        %s439 = sand.u32 %s163, 1
        %s440 = smul.addr %s439, 64
        %s441 = scalar_lea.vmem [#allocation16], %s440
        // Predicated region
        $region53: #{tpu_custom_call.1} parent=43 // pred_check
          %p442 = pneg %p176
        $region54: #{tpu_custom_call.1} parent=43 // pred_check_branch
          %444 = sbr.rel (%p442) target = $region56
        $region55: #{tpu_custom_call.1} parent=43 // pred_region
          %445 = dma.done %s438, 1024
        $region56: #{tpu_custom_call.1} parent=43 // pred_fallthru
          _
        %s446 = sand.u32 %s64, 1
        %s447 = scalar_lea.sflag [#allocation18], %s446
        %s448 = sand.u32 %s193, 1
        %s449 = smul.addr %s448, 64
        %s450 = scalar_lea.vmem [#allocation17], %s449
        // Predicated region
        $region57: #{tpu_custom_call.1} parent=43 // pred_check
          %p451 = pneg %p206
        $region58: #{tpu_custom_call.1} parent=43 // pred_check_branch
          %453 = sbr.rel (%p451) target = $region60
        $region59: #{tpu_custom_call.1} parent=43 // pred_region
          %454 = dma.done %s447, 1024
        $region60: #{tpu_custom_call.1} parent=43 // pred_fallthru
          _
        // Predicated region
        $region61: #{tpu_custom_call.1} parent=43 // pred_check
          %p455 = pneg %p227
        $region62: #{tpu_custom_call.1} parent=43 // pred_check_branch
          %457 = sbr.rel (%p455) target = $region64
        $region63: #{tpu_custom_call.1} parent=43 // pred_region
          %458 = dma.done [#allocation18], 1024
        $region64: #{tpu_custom_call.1} parent=43 // pred_fallthru
          _
        %s459 = sand.u32 %s101, 1
        %s460 = scalar_lea.sflag [#allocation12], %s459
        %s461 = sand.u32 %s101, 1
        %s462 = smul.addr %s461, 64
        %s463 = scalar_lea.vmem [#allocation11], %s462
        %p464 = pneg %p114
        %p465 = pneg %p111
        %s466 = sand.u32 %s64, 1
        %s467 = scalar_lea.sflag [#allocation15], %s466
        %s468 = sand.u32 %s137, 1
        %s469 = smul.addr %s468, 64
        %s470 = scalar_lea.vmem [#allocation14], %s469
        %p471 = pneg %p150
        %p472 = pneg %p147
        %s473 = sand.u32 %s64, 1
        %s474 = scalar_lea.sflag [#allocation15], %s473
        %s475 = sand.u32 %s163, 1
        %s476 = smul.addr %s475, 64
        %s477 = scalar_lea.vmem [#allocation16], %s476
        %p478 = pneg %p176
        %p479 = pneg %p173
        %s480 = sand.u32 %s64, 1
        %s481 = scalar_lea.sflag [#allocation18], %s480
        %s482 = sand.u32 %s193, 1
        %s483 = smul.addr %s482, 64
        %s484 = scalar_lea.vmem [#allocation17], %s483
        %p485 = pneg %p206
        %p486 = pneg %p203
        %p487 = pneg %p227
        %p488 = pneg %p224
        %p489 = pneg %p248
        %p490 = pneg %p245
        %p491 = pneg %p278
        %p492 = pneg %p275
        %s493 = sand.u32 %s265, 1
        %s494 = scalar_lea.sflag [#allocation13], %s493
        %s495 = sand.u32 %s265, 1
        %s496 = smul.addr %s495, 128
        %s497 = scalar_lea.vmem [#allocation20], %s496
        %s498 = sadd.s32 %s70, %s69
        %s499 = sadd.s32 %s498, %s71
        %s500 = sld [smem:[#allocation10 + %s499]]
        %s501 = smul.u32 16, %s69
        %s502 = sld [smem:[#allocation4 + %s70]]
        %s503 = sadd.s32 %s70, %s69
        %s504 = sadd.s32 %s503, %s71
        %s505 = sld [smem:[#allocation10 + %s504]]
        %s506 = smul.u32 16, %s505
        %s507 = sld [smem:[#allocation5 + %s70]]
        %s508 = smul.u32 16, %s69
        %s509 = sld [smem:[#allocation6 + %s70]]
        %s510 = smul.u32 16, %s69
        %s512 = sld [smem:[#allocation7 + %s70]]
        %p513 = scmp.eq.s32.totalorder %s512, 1
        %s514 = sld [smem:[#allocation8 + %s70]]
        %p515 = scmp.eq.s32.totalorder %s514, 1
        %s516 = sadd.s32 %s70, %s69
        %s517 = sld [smem:[#allocation9 + %s516]]
        %p518 = scmp.eq.s32.totalorder %s71, 0
        %p519 = pnand %p513, %p518
        %p520 = pneg %p519
        // Predicated region
        $region65: #{tpu_custom_call.1} parent=43 // pred_check
          _
        $region66: #{tpu_custom_call.1} parent=43 // pred_check_branch
          %522 = sbr.rel (%p519) target = $region68
        $region67: #{tpu_custom_call.1} parent=43 // pred_region
          %v523 = vld [vmem:[%s450] sm:$0xf]
          %v524 = vld [vmem:[%s450 + $0x4] sm:$0xf]
          %v525 = vld [vmem:[%s450 + $0x8] sm:$0xf]
          %v526 = vld [vmem:[%s450 + $0xc] sm:$0xf]
          %v527 = vld [vmem:[%s450 + $0x10] sm:$0xf]
          %v528 = vld [vmem:[%s450 + $0x14] sm:$0xf]
          %v529 = vld [vmem:[%s450 + $0x18] sm:$0xf]
          %v530 = vld [vmem:[%s450 + $0x1c] sm:$0xf]
          %v531 = vld [vmem:[%s450 + $0x20] sm:$0xf]
          %v532 = vld [vmem:[%s450 + $0x24] sm:$0xf]
          %v533 = vld [vmem:[%s450 + $0x28] sm:$0xf]
          %v534 = vld [vmem:[%s450 + $0x2c] sm:$0xf]
          %v535 = vld [vmem:[%s450 + $0x30] sm:$0xf]
          %v536 = vld [vmem:[%s450 + $0x34] sm:$0xf]
          %v537 = vld [vmem:[%s450 + $0x38] sm:$0xf]
          %v538 = vld [vmem:[%s450 + $0x3c] sm:$0xf]
          %v539 = vld [vmem:[#allocation19] sm:$0xf]
          %v540 = vld [vmem:[#allocation19 + $0x4] sm:$0xf]
          %v541 = vld [vmem:[#allocation19 + $0x8] sm:$0xf]
          %v542 = vld [vmem:[#allocation19 + $0xc] sm:$0xf]
          %v543 = vld [vmem:[#allocation19 + $0x10] sm:$0xf]
          %v544 = vld [vmem:[#allocation19 + $0x14] sm:$0xf]
          %v545 = vld [vmem:[#allocation19 + $0x18] sm:$0xf]
          %v546 = vld [vmem:[#allocation19 + $0x1c] sm:$0xf]
          %v547 = vld [vmem:[#allocation19 + $0x20] sm:$0xf]
          %v548 = vld [vmem:[#allocation19 + $0x24] sm:$0xf]
          %v549 = vld [vmem:[#allocation19 + $0x28] sm:$0xf]
          %v550 = vld [vmem:[#allocation19 + $0x2c] sm:$0xf]
          %v551 = vld [vmem:[#allocation19 + $0x30] sm:$0xf]
          %v552 = vld [vmem:[#allocation19 + $0x34] sm:$0xf]
          %v553 = vld [vmem:[#allocation19 + $0x38] sm:$0xf]
          %v554 = vld [vmem:[#allocation19 + $0x3c] sm:$0xf]
          %v555 = vld [vmem:[%s12] sm:$0x1]
          %v557 = vlaneseq
          %v558 = vshrl.u32 %v557, 7
          %v559 = vsub.s32 0, %v558
          %v560 = vrot.slane %v555, %v559
          %v578 = vunpack.c.l.b16 %v523
          %v579 = vunpack.c.l.b16 %v524
          %v580 = vunpack.c.l.b16 %v525
          %v581 = vunpack.c.l.b16 %v526
          %v582 = vunpack.c.l.b16 %v527
          %v583 = vunpack.c.l.b16 %v528
          %v584 = vunpack.c.l.b16 %v529
          %v585 = vunpack.c.l.b16 %v530
          %v586 = vunpack.c.l.b16 %v531
          %v587 = vunpack.c.l.b16 %v532
          %v588 = vunpack.c.l.b16 %v533
          %v589 = vunpack.c.l.b16 %v534
          %v590 = vunpack.c.l.b16 %v535
          %v591 = vunpack.c.l.b16 %v536
          %v592 = vunpack.c.l.b16 %v537
          %v593 = vunpack.c.l.b16 %v538
          %v594 = vpack.c.b16 %v579, %v578
          %v595 = vpack.c.b16 %v581, %v580
          %v596 = vpack.c.b16 %v583, %v582
          %v597 = vpack.c.b16 %v585, %v584
          %v598 = vpack.c.b16 %v587, %v586
          %v599 = vpack.c.b16 %v589, %v588
          %v600 = vpack.c.b16 %v591, %v590
          %v601 = vpack.c.b16 %v593, %v592
          %v626 = vunpack.c.l.b16 %v539
          %v627 = vunpack.c.l.b16 %v540
          %v628 = vunpack.c.l.b16 %v541
          %v629 = vunpack.c.l.b16 %v542
          %v630 = vunpack.c.l.b16 %v543
          %v631 = vunpack.c.l.b16 %v544
          %v632 = vunpack.c.l.b16 %v545
          %v633 = vunpack.c.l.b16 %v546
          %v634 = vunpack.c.l.b16 %v547
          %v635 = vunpack.c.l.b16 %v548
          %v636 = vunpack.c.l.b16 %v549
          %v637 = vunpack.c.l.b16 %v550
          %v638 = vunpack.c.l.b16 %v551
          %v639 = vunpack.c.l.b16 %v552
          %v640 = vunpack.c.l.b16 %v553
          %v641 = vunpack.c.l.b16 %v554
          %v642 = vpack.c.b16 %v627, %v626
          %v643 = vpack.c.b16 %v629, %v628
          %v644 = vpack.c.b16 %v631, %v630
          %v645 = vpack.c.b16 %v633, %v632
          %v646 = vpack.c.b16 %v635, %v634
          %v647 = vpack.c.b16 %v637, %v636
          %v648 = vpack.c.b16 %v639, %v638
          %v649 = vpack.c.b16 %v641, %v640
          %658 = vmatprep.subr.bf16.mxu0 0
          %659 = vmatpush1.bf16.msra.mxu0 %v649
          %660 = vmatprep.subr.bf16.mxu0 0
          %661 = vmatpush1.bf16.msra.mxu0 %v648
          %662 = vmatprep.subr.bf16.mxu0 0
          %663 = vmatpush1.bf16.msra.mxu0 %v647
          %664 = vmatprep.subr.bf16.mxu0 0
          %665 = vmatpush1.bf16.msra.mxu0 %v646
          %666 = vmatprep.subr.bf16.mxu0 0
          %667 = vmatpush1.bf16.msra.mxu0 %v645
          %668 = vmatprep.subr.bf16.mxu0 0
          %669 = vmatpush1.bf16.msra.mxu0 %v644
          %670 = vmatprep.subr.bf16.mxu0 0
          %671 = vmatpush1.bf16.msra.mxu0 %v643
          %672 = vmatprep.subr.bf16.mxu0 0
          %673 = vmatpush1.bf16.msra.mxu0 %v642
          %674 = vmatprep.subr.bf16.mxu0 0
          %675 = vmatpush2.bf16.msra.mxu0 0
          %676 = vmatprep.subr.bf16.mxu0 0
          %677 = vmatpush2.bf16.msra.mxu0 0
          %678 = vmatprep.subr.bf16.mxu0 0
          %679 = vmatpush2.bf16.msra.mxu0 0
          %680 = vmatprep.subr.bf16.mxu0 0
          %681 = vmatpush2.bf16.msra.mxu0 0
          %682 = vmatprep.subr.bf16.mxu0 0
          %683 = vmatpush2.bf16.msra.mxu0 0
          %684 = vmatprep.subr.bf16.mxu0 0
          %685 = vmatpush2.bf16.msra.mxu0 0
          %686 = vmatprep.subr.bf16.mxu0 0
          %687 = vmatpush2.bf16.msra.mxu0 0
          %688 = vmatprep.subr.bf16.mxu0 0
          %689 = vmatpush2.bf16.msra.mxu0 0
          %690 = vmatprep.mubr.bf16.mxu0 0
          %691 = vmatmul.mubr.bf16.gmra.mxu0 %v594
          %v692 = vpop.f32.mrf.mxu0
          %v693 = vadd.f32 %v560, %v692
          %v694 = vpop.f32.mrf.mxu0
          %v695 = vpop.f32.mrf.mxu0
          %v696 = vadd.f32 %v560, %v695
          %v697 = vpop.f32.mrf.mxu0
          %698 = vmatprep.mubr.bf16.mxu0 0
          %699 = vmatmul.mubr.bf16.gmra.mxu0 %v595
          %v700 = vpop.f32.mrf.mxu0
          %v701 = vadd.f32 %v560, %v700
          %v702 = vpop.f32.mrf.mxu0
          %v703 = vpop.f32.mrf.mxu0
          %v704 = vadd.f32 %v560, %v703
          %v705 = vpop.f32.mrf.mxu0
          %706 = vmatprep.mubr.bf16.mxu0 0
          %707 = vmatmul.mubr.bf16.gmra.mxu0 %v596
          %v708 = vpop.f32.mrf.mxu0
          %v709 = vadd.f32 %v560, %v708
          %v710 = vpop.f32.mrf.mxu0
          %v711 = vpop.f32.mrf.mxu0
          %v712 = vadd.f32 %v560, %v711
          %v713 = vpop.f32.mrf.mxu0
          %714 = vmatprep.mubr.bf16.mxu0 0
          %715 = vmatmul.mubr.bf16.gmra.mxu0 %v597
          %v716 = vpop.f32.mrf.mxu0
          %v717 = vadd.f32 %v560, %v716
          %v718 = vpop.f32.mrf.mxu0
          %v719 = vpop.f32.mrf.mxu0
          %v720 = vadd.f32 %v560, %v719
          %v721 = vpop.f32.mrf.mxu0
          %722 = vmatprep.mubr.bf16.mxu0 0
          %723 = vmatmul.mubr.bf16.gmra.mxu0 %v598
          %v724 = vpop.f32.mrf.mxu0
          %v725 = vadd.f32 %v560, %v724
          %v726 = vpop.f32.mrf.mxu0
          %v727 = vpop.f32.mrf.mxu0
          %v728 = vadd.f32 %v560, %v727
          %v729 = vpop.f32.mrf.mxu0
          %730 = vmatprep.mubr.bf16.mxu0 0
          %731 = vmatmul.mubr.bf16.gmra.mxu0 %v599
          %v732 = vpop.f32.mrf.mxu0
          %v733 = vadd.f32 %v560, %v732
          %v734 = vpop.f32.mrf.mxu0
          %v735 = vpop.f32.mrf.mxu0
          %v736 = vadd.f32 %v560, %v735
          %v737 = vpop.f32.mrf.mxu0
          %738 = vmatprep.mubr.bf16.mxu0 0
          %739 = vmatmul.mubr.bf16.gmra.mxu0 %v600
          %v740 = vpop.f32.mrf.mxu0
          %v741 = vadd.f32 %v560, %v740
          %v742 = vpop.f32.mrf.mxu0
          %v743 = vpop.f32.mrf.mxu0
          %v744 = vadd.f32 %v560, %v743
          %v745 = vpop.f32.mrf.mxu0
          %746 = vmatprep.mubr.bf16.mxu0 0
          %747 = vmatmul.mubr.bf16.gmra.mxu0 %v601
          %v748 = vpop.f32.mrf.mxu0
          %v749 = vadd.f32 %v560, %v748
          %v750 = vpop.f32.mrf.mxu0
          %v751 = vpop.f32.mrf.mxu0
          %v752 = vadd.f32 %v560, %v751
          %v753 = vpop.f32.mrf.mxu0
          %754 = vdwg.mxu0
          %755 = vst [vmem:[%s497] sm:$0xff] %v693
          %756 = vst [vmem:[%s497 + $0x8] sm:$0xff] %v696
          %757 = vst [vmem:[%s497 + $0x10] sm:$0xff] %v701
          %758 = vst [vmem:[%s497 + $0x18] sm:$0xff] %v704
          %759 = vst [vmem:[%s497 + $0x20] sm:$0xff] %v709
          %760 = vst [vmem:[%s497 + $0x28] sm:$0xff] %v712
          %761 = vst [vmem:[%s497 + $0x30] sm:$0xff] %v717
          %762 = vst [vmem:[%s497 + $0x38] sm:$0xff] %v720
          %763 = vst [vmem:[%s497 + $0x40] sm:$0xff] %v725
          %764 = vst [vmem:[%s497 + $0x48] sm:$0xff] %v728
          %765 = vst [vmem:[%s497 + $0x50] sm:$0xff] %v733
          %766 = vst [vmem:[%s497 + $0x58] sm:$0xff] %v736
          %767 = vst [vmem:[%s497 + $0x60] sm:$0xff] %v741
          %768 = vst [vmem:[%s497 + $0x68] sm:$0xff] %v744
          %769 = vst [vmem:[%s497 + $0x70] sm:$0xff] %v749
          %770 = vst [vmem:[%s497 + $0x78] sm:$0xff] %v752
        $region68: #{tpu_custom_call.1} parent=43 // pred_fallthru
          _
        // Predicated region
        $region69: #{tpu_custom_call.1} parent=43 // pred_check
          %p771 = pneg %p518
        $region70: #{tpu_custom_call.1} parent=43 // pred_check_branch
          %773 = sbr.rel (%p771) target = $region72
        $region71: #{tpu_custom_call.1} parent=43 // pred_region
          %774 = vst [vmem:[#allocation2] sm:$0xff] 0.0
          %775 = vst [vmem:[#allocation2 + $0x8] sm:$0xff] 0.0
          %776 = vst [vmem:[#allocation2 + $0x10] sm:$0xff] 0.0
          %777 = vst [vmem:[#allocation2 + $0x18] sm:$0xff] 0.0
          %778 = vst [vmem:[#allocation2 + $0x20] sm:$0xff] 0.0
          %779 = vst [vmem:[#allocation2 + $0x28] sm:$0xff] 0.0
          %780 = vst [vmem:[#allocation2 + $0x30] sm:$0xff] 0.0
          %781 = vst [vmem:[#allocation2 + $0x38] sm:$0xff] 0.0
          %782 = vst [vmem:[#allocation2 + $0x40] sm:$0xff] 0.0
          %783 = vst [vmem:[#allocation2 + $0x48] sm:$0xff] 0.0
          %784 = vst [vmem:[#allocation2 + $0x50] sm:$0xff] 0.0
          %785 = vst [vmem:[#allocation2 + $0x58] sm:$0xff] 0.0
          %786 = vst [vmem:[#allocation2 + $0x60] sm:$0xff] 0.0
          %787 = vst [vmem:[#allocation2 + $0x68] sm:$0xff] 0.0
          %788 = vst [vmem:[#allocation2 + $0x70] sm:$0xff] 0.0
          %789 = vst [vmem:[#allocation2 + $0x78] sm:$0xff] 0.0
        $region72: #{tpu_custom_call.1} parent=43 // pred_fallthru
          _
        %p790 = scmp.lt.s32.totalorder %s71, %s517
        // Predicated region
        $region73: #{tpu_custom_call.1} parent=43 // pred_check
          %p791 = pneg %p790
        $region74: #{tpu_custom_call.1} parent=43 // pred_check_branch
          %793 = sbr.rel (%p791) target = $region76
        $region75: #{tpu_custom_call.1} parent=43 // pred_region
          %v794 = vld [vmem:[#allocation2] sm:$0xff]
          %v795 = vld [vmem:[#allocation2 + $0x8] sm:$0xff]
          %v796 = vld [vmem:[#allocation2 + $0x10] sm:$0xff]
          %v797 = vld [vmem:[#allocation2 + $0x18] sm:$0xff]
          %v798 = vld [vmem:[#allocation2 + $0x20] sm:$0xff]
          %v799 = vld [vmem:[#allocation2 + $0x28] sm:$0xff]
          %v800 = vld [vmem:[#allocation2 + $0x30] sm:$0xff]
          %v801 = vld [vmem:[#allocation2 + $0x38] sm:$0xff]
          %v802 = vld [vmem:[#allocation2 + $0x40] sm:$0xff]
          %v803 = vld [vmem:[#allocation2 + $0x48] sm:$0xff]
          %v804 = vld [vmem:[#allocation2 + $0x50] sm:$0xff]
          %v805 = vld [vmem:[#allocation2 + $0x58] sm:$0xff]
          %v806 = vld [vmem:[#allocation2 + $0x60] sm:$0xff]
          %v807 = vld [vmem:[#allocation2 + $0x68] sm:$0xff]
          %v808 = vld [vmem:[#allocation2 + $0x70] sm:$0xff]
          %v809 = vld [vmem:[#allocation2 + $0x78] sm:$0xff]
          %v810 = vld [vmem:[%s423] sm:$0xf]
          %v811 = vld [vmem:[%s423 + $0x4] sm:$0xf]
          %v812 = vld [vmem:[%s423 + $0x8] sm:$0xf]
          %v813 = vld [vmem:[%s423 + $0xc] sm:$0xf]
          %v814 = vld [vmem:[%s423 + $0x10] sm:$0xf]
          %v815 = vld [vmem:[%s423 + $0x14] sm:$0xf]
          %v816 = vld [vmem:[%s423 + $0x18] sm:$0xf]
          %v817 = vld [vmem:[%s423 + $0x1c] sm:$0xf]
          %v818 = vld [vmem:[%s423 + $0x20] sm:$0xf]
          %v819 = vld [vmem:[%s423 + $0x24] sm:$0xf]
          %v820 = vld [vmem:[%s423 + $0x28] sm:$0xf]
          %v821 = vld [vmem:[%s423 + $0x2c] sm:$0xf]
          %v822 = vld [vmem:[%s423 + $0x30] sm:$0xf]
          %v823 = vld [vmem:[%s423 + $0x34] sm:$0xf]
          %v824 = vld [vmem:[%s423 + $0x38] sm:$0xf]
          %v825 = vld [vmem:[%s423 + $0x3c] sm:$0xf]
          %v826 = vld [vmem:[%s432] sm:$0xf]
          %v827 = vld [vmem:[%s432 + $0x4] sm:$0xf]
          %v828 = vld [vmem:[%s432 + $0x8] sm:$0xf]
          %v829 = vld [vmem:[%s432 + $0xc] sm:$0xf]
          %v830 = vld [vmem:[%s432 + $0x10] sm:$0xf]
          %v831 = vld [vmem:[%s432 + $0x14] sm:$0xf]
          %v832 = vld [vmem:[%s432 + $0x18] sm:$0xf]
          %v833 = vld [vmem:[%s432 + $0x1c] sm:$0xf]
          %v834 = vld [vmem:[%s432 + $0x20] sm:$0xf]
          %v835 = vld [vmem:[%s432 + $0x24] sm:$0xf]
          %v836 = vld [vmem:[%s432 + $0x28] sm:$0xf]
          %v837 = vld [vmem:[%s432 + $0x2c] sm:$0xf]
          %v838 = vld [vmem:[%s432 + $0x30] sm:$0xf]
          %v839 = vld [vmem:[%s432 + $0x34] sm:$0xf]
          %v840 = vld [vmem:[%s432 + $0x38] sm:$0xf]
          %v841 = vld [vmem:[%s432 + $0x3c] sm:$0xf]
          %v858 = vunpack.c.l.b16 %v810
          %v859 = vunpack.c.l.b16 %v811
          %v860 = vunpack.c.l.b16 %v812
          %v861 = vunpack.c.l.b16 %v813
          %v862 = vunpack.c.l.b16 %v814
          %v863 = vunpack.c.l.b16 %v815
          %v864 = vunpack.c.l.b16 %v816
          %v865 = vunpack.c.l.b16 %v817
          %v866 = vunpack.c.l.b16 %v818
          %v867 = vunpack.c.l.b16 %v819
          %v868 = vunpack.c.l.b16 %v820
          %v869 = vunpack.c.l.b16 %v821
          %v870 = vunpack.c.l.b16 %v822
          %v871 = vunpack.c.l.b16 %v823
          %v872 = vunpack.c.l.b16 %v824
          %v873 = vunpack.c.l.b16 %v825
          %v874 = vpack.c.b16 %v859, %v858
          %v875 = vpack.c.b16 %v861, %v860
          %v876 = vpack.c.b16 %v863, %v862
          %v877 = vpack.c.b16 %v865, %v864
          %v878 = vpack.c.b16 %v867, %v866
          %v879 = vpack.c.b16 %v869, %v868
          %v880 = vpack.c.b16 %v871, %v870
          %v881 = vpack.c.b16 %v873, %v872
          %v906 = vunpack.c.l.b16 %v826
          %v907 = vunpack.c.l.b16 %v827
          %v908 = vunpack.c.l.b16 %v828
          %v909 = vunpack.c.l.b16 %v829
          %v910 = vunpack.c.l.b16 %v830
          %v911 = vunpack.c.l.b16 %v831
          %v912 = vunpack.c.l.b16 %v832
          %v913 = vunpack.c.l.b16 %v833
          %v914 = vunpack.c.l.b16 %v834
          %v915 = vunpack.c.l.b16 %v835
          %v916 = vunpack.c.l.b16 %v836
          %v917 = vunpack.c.l.b16 %v837
          %v918 = vunpack.c.l.b16 %v838
          %v919 = vunpack.c.l.b16 %v839
          %v920 = vunpack.c.l.b16 %v840
          %v921 = vunpack.c.l.b16 %v841
          %v922 = vpack.c.b16 %v907, %v906
          %v923 = vpack.c.b16 %v909, %v908
          %v924 = vpack.c.b16 %v911, %v910
          %v925 = vpack.c.b16 %v913, %v912
          %v926 = vpack.c.b16 %v915, %v914
          %v927 = vpack.c.b16 %v917, %v916
          %v928 = vpack.c.b16 %v919, %v918
          %v929 = vpack.c.b16 %v921, %v920
          %938 = vmatprep.subr.bf16.mxu0 0
          %939 = vmatpush1.bf16.msra.mxu0 %v929
          %940 = vmatprep.subr.bf16.mxu0 0
          %941 = vmatpush1.bf16.msra.mxu0 %v928
          %942 = vmatprep.subr.bf16.mxu0 0
          %943 = vmatpush1.bf16.msra.mxu0 %v927
          %944 = vmatprep.subr.bf16.mxu0 0
          %945 = vmatpush1.bf16.msra.mxu0 %v926
          %946 = vmatprep.subr.bf16.mxu0 0
          %947 = vmatpush1.bf16.msra.mxu0 %v925
          %948 = vmatprep.subr.bf16.mxu0 0
          %949 = vmatpush1.bf16.msra.mxu0 %v924
          %950 = vmatprep.subr.bf16.mxu0 0
          %951 = vmatpush1.bf16.msra.mxu0 %v923
          %952 = vmatprep.subr.bf16.mxu0 0
          %953 = vmatpush1.bf16.msra.mxu0 %v922
          %954 = vmatprep.subr.bf16.mxu0 0
          %955 = vmatpush2.bf16.msra.mxu0 0
          %956 = vmatprep.subr.bf16.mxu0 0
          %957 = vmatpush2.bf16.msra.mxu0 0
          %958 = vmatprep.subr.bf16.mxu0 0
          %959 = vmatpush2.bf16.msra.mxu0 0
          %960 = vmatprep.subr.bf16.mxu0 0
          %961 = vmatpush2.bf16.msra.mxu0 0
          %962 = vmatprep.subr.bf16.mxu0 0
          %963 = vmatpush2.bf16.msra.mxu0 0
          %964 = vmatprep.subr.bf16.mxu0 0
          %965 = vmatpush2.bf16.msra.mxu0 0
          %966 = vmatprep.subr.bf16.mxu0 0
          %967 = vmatpush2.bf16.msra.mxu0 0
          %968 = vmatprep.subr.bf16.mxu0 0
          %969 = vmatpush2.bf16.msra.mxu0 0
          %970 = vmatprep.mubr.bf16.mxu0 0
          %971 = vmatmul.mubr.bf16.gmra.mxu0 %v874
          %v972 = vpop.f32.mrf.mxu0
          %v973 = vadd.f32 0.0, %v972
          %v974 = vpop.f32.mrf.mxu0
          %v975 = vpop.f32.mrf.mxu0
          %v976 = vadd.f32 0.0, %v975
          %v977 = vpop.f32.mrf.mxu0
          %978 = vmatprep.mubr.bf16.mxu0 0
          %979 = vmatmul.mubr.bf16.gmra.mxu0 %v875
          %v980 = vpop.f32.mrf.mxu0
          %v981 = vadd.f32 0.0, %v980
          %v982 = vpop.f32.mrf.mxu0
          %v983 = vpop.f32.mrf.mxu0
          %v984 = vadd.f32 0.0, %v983
          %v985 = vpop.f32.mrf.mxu0
          %986 = vmatprep.mubr.bf16.mxu0 0
          %987 = vmatmul.mubr.bf16.gmra.mxu0 %v876
          %v988 = vpop.f32.mrf.mxu0
          %v989 = vadd.f32 0.0, %v988
          %v990 = vpop.f32.mrf.mxu0
          %v991 = vpop.f32.mrf.mxu0
          %v992 = vadd.f32 0.0, %v991
          %v993 = vpop.f32.mrf.mxu0
          %994 = vmatprep.mubr.bf16.mxu0 0
          %995 = vmatmul.mubr.bf16.gmra.mxu0 %v877
          %v996 = vpop.f32.mrf.mxu0
          %v997 = vadd.f32 0.0, %v996
          %v998 = vpop.f32.mrf.mxu0
          %v999 = vpop.f32.mrf.mxu0
          %v1000 = vadd.f32 0.0, %v999
          %v1001 = vpop.f32.mrf.mxu0
          %1002 = vmatprep.mubr.bf16.mxu0 0
          %1003 = vmatmul.mubr.bf16.gmra.mxu0 %v878
          %v1004 = vpop.f32.mrf.mxu0
          %v1005 = vadd.f32 0.0, %v1004
          %v1006 = vpop.f32.mrf.mxu0
          %v1007 = vpop.f32.mrf.mxu0
          %v1008 = vadd.f32 0.0, %v1007
          %v1009 = vpop.f32.mrf.mxu0
          %1010 = vmatprep.mubr.bf16.mxu0 0
          %1011 = vmatmul.mubr.bf16.gmra.mxu0 %v879
          %v1012 = vpop.f32.mrf.mxu0
          %v1013 = vadd.f32 0.0, %v1012
          %v1014 = vpop.f32.mrf.mxu0
          %v1015 = vpop.f32.mrf.mxu0
          %v1016 = vadd.f32 0.0, %v1015
          %v1017 = vpop.f32.mrf.mxu0
          %1018 = vmatprep.mubr.bf16.mxu0 0
          %1019 = vmatmul.mubr.bf16.gmra.mxu0 %v880
          %v1020 = vpop.f32.mrf.mxu0
          %v1021 = vadd.f32 0.0, %v1020
          %v1022 = vpop.f32.mrf.mxu0
          %v1023 = vpop.f32.mrf.mxu0
          %v1024 = vadd.f32 0.0, %v1023
          %v1025 = vpop.f32.mrf.mxu0
          %1026 = vmatprep.mubr.bf16.mxu0 0
          %1027 = vmatmul.mubr.bf16.gmra.mxu0 %v881
          %v1028 = vpop.f32.mrf.mxu0
          %v1029 = vadd.f32 0.0, %v1028
          %v1030 = vpop.f32.mrf.mxu0
          %v1031 = vpop.f32.mrf.mxu0
          %v1032 = vadd.f32 0.0, %v1031
          %v1033 = vpop.f32.mrf.mxu0
          %1034 = vdwg.mxu0
          %v1035 = vadd.f32 %v794, %v973
          %v1036 = vadd.f32 %v795, %v976
          %v1037 = vadd.f32 %v796, %v981
          %v1038 = vadd.f32 %v797, %v984
          %v1039 = vadd.f32 %v798, %v989
          %v1040 = vadd.f32 %v799, %v992
          %v1041 = vadd.f32 %v800, %v997
          %v1042 = vadd.f32 %v801, %v1000
          %v1043 = vadd.f32 %v802, %v1005
          %v1044 = vadd.f32 %v803, %v1008
          %v1045 = vadd.f32 %v804, %v1013
          %v1046 = vadd.f32 %v805, %v1016
          %v1047 = vadd.f32 %v806, %v1021
          %v1048 = vadd.f32 %v807, %v1024
          %v1049 = vadd.f32 %v808, %v1029
          %v1050 = vadd.f32 %v809, %v1032
          %1051 = vst [vmem:[#allocation2] sm:$0xff] %v1035
          %1052 = vst [vmem:[#allocation2 + $0x8] sm:$0xff] %v1036
          %1053 = vst [vmem:[#allocation2 + $0x10] sm:$0xff] %v1037
          %1054 = vst [vmem:[#allocation2 + $0x18] sm:$0xff] %v1038
          %1055 = vst [vmem:[#allocation2 + $0x20] sm:$0xff] %v1039
          %1056 = vst [vmem:[#allocation2 + $0x28] sm:$0xff] %v1040
          %1057 = vst [vmem:[#allocation2 + $0x30] sm:$0xff] %v1041
          %1058 = vst [vmem:[#allocation2 + $0x38] sm:$0xff] %v1042
          %1059 = vst [vmem:[#allocation2 + $0x40] sm:$0xff] %v1043
          %1060 = vst [vmem:[#allocation2 + $0x48] sm:$0xff] %v1044
          %1061 = vst [vmem:[#allocation2 + $0x50] sm:$0xff] %v1045
          %1062 = vst [vmem:[#allocation2 + $0x58] sm:$0xff] %v1046
          %1063 = vst [vmem:[#allocation2 + $0x60] sm:$0xff] %v1047
          %1064 = vst [vmem:[#allocation2 + $0x68] sm:$0xff] %v1048
          %1065 = vst [vmem:[#allocation2 + $0x70] sm:$0xff] %v1049
          %1066 = vst [vmem:[#allocation2 + $0x78] sm:$0xff] %v1050
        $region76: #{tpu_custom_call.1} parent=43 // pred_fallthru
          _
        // Predicated region
        $region77: #{tpu_custom_call.1} parent=43 // pred_check
          %p1067 = pneg %p518
        $region78: #{tpu_custom_call.1} parent=43 // pred_check_branch
          %1069 = sbr.rel (%p1067) target = $region80
        $region79: #{tpu_custom_call.1} parent=43 // pred_region
          %p1070 = scmp.gt.s32.totalorder %s517, 0
          // Predicated region
          $region81: #{tpu_custom_call.1} parent=79 // pred_check
            %p1071 = pneg %p1070
          $region82: #{tpu_custom_call.1} parent=79 // pred_check_branch
            %1073 = sbr.rel (%p1071) target = $region84
          $region83: #{tpu_custom_call.1} parent=79 // pred_region
            %v1074 = vld [vmem:[#allocation2] sm:$0xff]
            %v1075 = vld [vmem:[#allocation2 + $0x8] sm:$0xff]
            %v1076 = vld [vmem:[#allocation2 + $0x10] sm:$0xff]
            %v1077 = vld [vmem:[#allocation2 + $0x18] sm:$0xff]
            %v1078 = vld [vmem:[#allocation2 + $0x20] sm:$0xff]
            %v1079 = vld [vmem:[#allocation2 + $0x28] sm:$0xff]
            %v1080 = vld [vmem:[#allocation2 + $0x30] sm:$0xff]
            %v1081 = vld [vmem:[#allocation2 + $0x38] sm:$0xff]
            %v1082 = vld [vmem:[#allocation2 + $0x40] sm:$0xff]
            %v1083 = vld [vmem:[#allocation2 + $0x48] sm:$0xff]
            %v1084 = vld [vmem:[#allocation2 + $0x50] sm:$0xff]
            %v1085 = vld [vmem:[#allocation2 + $0x58] sm:$0xff]
            %v1086 = vld [vmem:[#allocation2 + $0x60] sm:$0xff]
            %v1087 = vld [vmem:[#allocation2 + $0x68] sm:$0xff]
            %v1088 = vld [vmem:[#allocation2 + $0x70] sm:$0xff]
            %v1089 = vld [vmem:[#allocation2 + $0x78] sm:$0xff]
            %v1090 = vmax.f32 %v1074, 1.0
            %v1091 = vmax.f32 %v1075, 1.0
            %v1092 = vmax.f32 %v1076, 1.0
            %v1093 = vmax.f32 %v1077, 1.0
            %v1094 = vmax.f32 %v1078, 1.0
            %v1095 = vmax.f32 %v1079, 1.0
            %v1096 = vmax.f32 %v1080, 1.0
            %v1097 = vmax.f32 %v1081, 1.0
            %v1098 = vmax.f32 %v1082, 1.0
            %v1099 = vmax.f32 %v1083, 1.0
            %v1100 = vmax.f32 %v1084, 1.0
            %v1101 = vmax.f32 %v1085, 1.0
            %v1102 = vmax.f32 %v1086, 1.0
            %v1103 = vmax.f32 %v1087, 1.0
            %v1104 = vmax.f32 %v1088, 1.0
            %v1105 = vmax.f32 %v1089, 1.0
            %v1106 = vpack.c.bf16 %v1075, %v1074
            %v1107 = vpack.c.bf16 %v1077, %v1076
            %v1108 = vpack.c.bf16 %v1079, %v1078
            %v1109 = vpack.c.bf16 %v1081, %v1080
            %v1110 = vpack.c.bf16 %v1083, %v1082
            %v1111 = vpack.c.bf16 %v1085, %v1084
            %v1112 = vpack.c.bf16 %v1087, %v1086
            %v1113 = vpack.c.bf16 %v1089, %v1088
            %v1114 = vld [vmem:[%s441] sm:$0xf]
            %v1115 = vld [vmem:[%s441 + $0x4] sm:$0xf]
            %v1116 = vld [vmem:[%s441 + $0x8] sm:$0xf]
            %v1117 = vld [vmem:[%s441 + $0xc] sm:$0xf]
            %v1118 = vld [vmem:[%s441 + $0x10] sm:$0xf]
            %v1119 = vld [vmem:[%s441 + $0x14] sm:$0xf]
            %v1120 = vld [vmem:[%s441 + $0x18] sm:$0xf]
            %v1121 = vld [vmem:[%s441 + $0x1c] sm:$0xf]
            %v1122 = vld [vmem:[%s441 + $0x20] sm:$0xf]
            %v1123 = vld [vmem:[%s441 + $0x24] sm:$0xf]
            %v1124 = vld [vmem:[%s441 + $0x28] sm:$0xf]
            %v1125 = vld [vmem:[%s441 + $0x2c] sm:$0xf]
            %v1126 = vld [vmem:[%s441 + $0x30] sm:$0xf]
            %v1127 = vld [vmem:[%s441 + $0x34] sm:$0xf]
            %v1128 = vld [vmem:[%s441 + $0x38] sm:$0xf]
            %v1129 = vld [vmem:[%s441 + $0x3c] sm:$0xf]
            %v1146 = vunpack.c.l.b16 %v1114
            %v1147 = vunpack.c.l.b16 %v1115
            %v1148 = vunpack.c.l.b16 %v1116
            %v1149 = vunpack.c.l.b16 %v1117
            %v1150 = vunpack.c.l.b16 %v1118
            %v1151 = vunpack.c.l.b16 %v1119
            %v1152 = vunpack.c.l.b16 %v1120
            %v1153 = vunpack.c.l.b16 %v1121
            %v1154 = vunpack.c.l.b16 %v1122
            %v1155 = vunpack.c.l.b16 %v1123
            %v1156 = vunpack.c.l.b16 %v1124
            %v1157 = vunpack.c.l.b16 %v1125
            %v1158 = vunpack.c.l.b16 %v1126
            %v1159 = vunpack.c.l.b16 %v1127
            %v1160 = vunpack.c.l.b16 %v1128
            %v1161 = vunpack.c.l.b16 %v1129
            %v1162 = vpack.c.b16 %v1147, %v1146
            %v1163 = vpack.c.b16 %v1149, %v1148
            %v1164 = vpack.c.b16 %v1151, %v1150
            %v1165 = vpack.c.b16 %v1153, %v1152
            %v1166 = vpack.c.b16 %v1155, %v1154
            %v1167 = vpack.c.b16 %v1157, %v1156
            %v1168 = vpack.c.b16 %v1159, %v1158
            %v1169 = vpack.c.b16 %v1161, %v1160
            %1178 = vmatprep.subr.bf16.mxu0 0
            %1179 = vmatpush1.bf16.msra.mxu0 %v1169
            %1180 = vmatprep.subr.bf16.mxu0 0
            %1181 = vmatpush1.bf16.msra.mxu0 %v1168
            %1182 = vmatprep.subr.bf16.mxu0 0
            %1183 = vmatpush1.bf16.msra.mxu0 %v1167
            %1184 = vmatprep.subr.bf16.mxu0 0
            %1185 = vmatpush1.bf16.msra.mxu0 %v1166
            %1186 = vmatprep.subr.bf16.mxu0 0
            %1187 = vmatpush1.bf16.msra.mxu0 %v1165
            %1188 = vmatprep.subr.bf16.mxu0 0
            %1189 = vmatpush1.bf16.msra.mxu0 %v1164
            %1190 = vmatprep.subr.bf16.mxu0 0
            %1191 = vmatpush1.bf16.msra.mxu0 %v1163
            %1192 = vmatprep.subr.bf16.mxu0 0
            %1193 = vmatpush1.bf16.msra.mxu0 %v1162
            %1194 = vmatprep.subr.bf16.mxu0 0
            %1195 = vmatpush2.bf16.msra.mxu0 0
            %1196 = vmatprep.subr.bf16.mxu0 0
            %1197 = vmatpush2.bf16.msra.mxu0 0
            %1198 = vmatprep.subr.bf16.mxu0 0
            %1199 = vmatpush2.bf16.msra.mxu0 0
            %1200 = vmatprep.subr.bf16.mxu0 0
            %1201 = vmatpush2.bf16.msra.mxu0 0
            %1202 = vmatprep.subr.bf16.mxu0 0
            %1203 = vmatpush2.bf16.msra.mxu0 0
            %1204 = vmatprep.subr.bf16.mxu0 0
            %1205 = vmatpush2.bf16.msra.mxu0 0
            %1206 = vmatprep.subr.bf16.mxu0 0
            %1207 = vmatpush2.bf16.msra.mxu0 0
            %1208 = vmatprep.subr.bf16.mxu0 0
            %1209 = vmatpush2.bf16.msra.mxu0 0
            %1210 = vmatprep.mubr.bf16.mxu0 0
            %1211 = vmatmul.mubr.bf16.gmra.mxu0 %v1106
            %v1212 = vpop.f32.mrf.mxu0
            %v1213 = vadd.f32 0.0, %v1212
            %v1214 = vpop.f32.mrf.mxu0
            %v1215 = vpop.f32.mrf.mxu0
            %v1216 = vadd.f32 0.0, %v1215
            %v1217 = vpop.f32.mrf.mxu0
            %1218 = vmatprep.mubr.bf16.mxu0 0
            %1219 = vmatmul.mubr.bf16.gmra.mxu0 %v1107
            %v1220 = vpop.f32.mrf.mxu0
            %v1221 = vadd.f32 0.0, %v1220
            %v1222 = vpop.f32.mrf.mxu0
            %v1223 = vpop.f32.mrf.mxu0
            %v1224 = vadd.f32 0.0, %v1223
            %v1225 = vpop.f32.mrf.mxu0
            %1226 = vmatprep.mubr.bf16.mxu0 0
            %1227 = vmatmul.mubr.bf16.gmra.mxu0 %v1108
            %v1228 = vpop.f32.mrf.mxu0
            %v1229 = vadd.f32 0.0, %v1228
            %v1230 = vpop.f32.mrf.mxu0
            %v1231 = vpop.f32.mrf.mxu0
            %v1232 = vadd.f32 0.0, %v1231
            %v1233 = vpop.f32.mrf.mxu0
            %1234 = vmatprep.mubr.bf16.mxu0 0
            %1235 = vmatmul.mubr.bf16.gmra.mxu0 %v1109
            %v1236 = vpop.f32.mrf.mxu0
            %v1237 = vadd.f32 0.0, %v1236
            %v1238 = vpop.f32.mrf.mxu0
            %v1239 = vpop.f32.mrf.mxu0
            %v1240 = vadd.f32 0.0, %v1239
            %v1241 = vpop.f32.mrf.mxu0
            %1242 = vmatprep.mubr.bf16.mxu0 0
            %1243 = vmatmul.mubr.bf16.gmra.mxu0 %v1110
            %v1244 = vpop.f32.mrf.mxu0
            %v1245 = vadd.f32 0.0, %v1244
            %v1246 = vpop.f32.mrf.mxu0
            %v1247 = vpop.f32.mrf.mxu0
            %v1248 = vadd.f32 0.0, %v1247
            %v1249 = vpop.f32.mrf.mxu0
            %1250 = vmatprep.mubr.bf16.mxu0 0
            %1251 = vmatmul.mubr.bf16.gmra.mxu0 %v1111
            %v1252 = vpop.f32.mrf.mxu0
            %v1253 = vadd.f32 0.0, %v1252
            %v1254 = vpop.f32.mrf.mxu0
            %v1255 = vpop.f32.mrf.mxu0
            %v1256 = vadd.f32 0.0, %v1255
            %v1257 = vpop.f32.mrf.mxu0
            %1258 = vmatprep.mubr.bf16.mxu0 0
            %1259 = vmatmul.mubr.bf16.gmra.mxu0 %v1112
            %v1260 = vpop.f32.mrf.mxu0
            %v1261 = vadd.f32 0.0, %v1260
            %v1262 = vpop.f32.mrf.mxu0
            %v1263 = vpop.f32.mrf.mxu0
            %v1264 = vadd.f32 0.0, %v1263
            %v1265 = vpop.f32.mrf.mxu0
            %1266 = vmatprep.mubr.bf16.mxu0 0
            %1267 = vmatmul.mubr.bf16.gmra.mxu0 %v1113
            %v1268 = vpop.f32.mrf.mxu0
            %v1269 = vadd.f32 0.0, %v1268
            %v1270 = vpop.f32.mrf.mxu0
            %v1271 = vpop.f32.mrf.mxu0
            %v1272 = vadd.f32 0.0, %v1271
            %v1273 = vpop.f32.mrf.mxu0
            %1274 = vdwg.mxu0
            %v1275 = vld [vmem:[%s497] sm:$0xff]
            %v1276 = vld [vmem:[%s497 + $0x8] sm:$0xff]
            %v1277 = vld [vmem:[%s497 + $0x10] sm:$0xff]
            %v1278 = vld [vmem:[%s497 + $0x18] sm:$0xff]
            %v1279 = vld [vmem:[%s497 + $0x20] sm:$0xff]
            %v1280 = vld [vmem:[%s497 + $0x28] sm:$0xff]
            %v1281 = vld [vmem:[%s497 + $0x30] sm:$0xff]
            %v1282 = vld [vmem:[%s497 + $0x38] sm:$0xff]
            %v1283 = vld [vmem:[%s497 + $0x40] sm:$0xff]
            %v1284 = vld [vmem:[%s497 + $0x48] sm:$0xff]
            %v1285 = vld [vmem:[%s497 + $0x50] sm:$0xff]
            %v1286 = vld [vmem:[%s497 + $0x58] sm:$0xff]
            %v1287 = vld [vmem:[%s497 + $0x60] sm:$0xff]
            %v1288 = vld [vmem:[%s497 + $0x68] sm:$0xff]
            %v1289 = vld [vmem:[%s497 + $0x70] sm:$0xff]
            %v1290 = vld [vmem:[%s497 + $0x78] sm:$0xff]
            %v1291 = vrcp.pop %v1090
            %v1292 = vrcp.pop %v1091
            %v1293 = vrcp.pop %v1092
            %v1294 = vrcp.pop %v1093
            %v1295 = vrcp.pop %v1094
            %v1296 = vrcp.pop %v1095
            %v1297 = vrcp.pop %v1096
            %v1298 = vrcp.pop %v1097
            %v1299 = vrcp.pop %v1098
            %v1300 = vrcp.pop %v1099
            %v1301 = vrcp.pop %v1100
            %v1302 = vrcp.pop %v1101
            %v1303 = vrcp.pop %v1102
            %v1304 = vrcp.pop %v1103
            %v1305 = vrcp.pop %v1104
            %v1306 = vrcp.pop %v1105
            %1308 = vset.pattern.permute.xlu0 32
            %1309 = vperm.xlu0 %1308, %v1291
            %v1310 = vpop.permute.xlu0 %1309
            %1313 = vset.pattern.permute.xlu0 32
            %1314 = vperm.xlu0 %1313, %v1292
            %v1315 = vpop.permute.xlu0 %1314
            %1318 = vset.pattern.permute.xlu0 32
            %1319 = vperm.xlu0 %1318, %v1293
            %v1320 = vpop.permute.xlu0 %1319
            %1323 = vset.pattern.permute.xlu0 32
            %1324 = vperm.xlu0 %1323, %v1294
            %v1325 = vpop.permute.xlu0 %1324
            %1328 = vset.pattern.permute.xlu0 32
            %1329 = vperm.xlu0 %1328, %v1295
            %v1330 = vpop.permute.xlu0 %1329
            %1333 = vset.pattern.permute.xlu0 32
            %1334 = vperm.xlu0 %1333, %v1296
            %v1335 = vpop.permute.xlu0 %1334
            %1338 = vset.pattern.permute.xlu0 32
            %1339 = vperm.xlu0 %1338, %v1297
            %v1340 = vpop.permute.xlu0 %1339
            %1343 = vset.pattern.permute.xlu0 32
            %1344 = vperm.xlu0 %1343, %v1298
            %v1345 = vpop.permute.xlu0 %1344
            %1348 = vset.pattern.permute.xlu0 32
            %1349 = vperm.xlu0 %1348, %v1299
            %v1350 = vpop.permute.xlu0 %1349
            %1353 = vset.pattern.permute.xlu0 32
            %1354 = vperm.xlu0 %1353, %v1300
            %v1355 = vpop.permute.xlu0 %1354
            %1358 = vset.pattern.permute.xlu0 32
            %1359 = vperm.xlu0 %1358, %v1301
            %v1360 = vpop.permute.xlu0 %1359
            %1363 = vset.pattern.permute.xlu0 32
            %1364 = vperm.xlu0 %1363, %v1302
            %v1365 = vpop.permute.xlu0 %1364
            %1368 = vset.pattern.permute.xlu0 32
            %1369 = vperm.xlu0 %1368, %v1303
            %v1370 = vpop.permute.xlu0 %1369
            %1373 = vset.pattern.permute.xlu0 32
            %1374 = vperm.xlu0 %1373, %v1304
            %v1375 = vpop.permute.xlu0 %1374
            %1378 = vset.pattern.permute.xlu0 32
            %1379 = vperm.xlu0 %1378, %v1305
            %v1380 = vpop.permute.xlu0 %1379
            %1383 = vset.pattern.permute.xlu0 32
            %1384 = vperm.xlu0 %1383, %v1306
            %v1385 = vpop.permute.xlu0 %1384
            %v1387 = vmul.f32 %v1213, %v1310
            %v1388 = vmul.f32 %v1216, %v1315
            %v1389 = vmul.f32 %v1221, %v1320
            %v1390 = vmul.f32 %v1224, %v1325
            %v1391 = vmul.f32 %v1229, %v1330
            %v1392 = vmul.f32 %v1232, %v1335
            %v1393 = vmul.f32 %v1237, %v1340
            %v1394 = vmul.f32 %v1240, %v1345
            %v1395 = vmul.f32 %v1245, %v1350
            %v1396 = vmul.f32 %v1248, %v1355
            %v1397 = vmul.f32 %v1253, %v1360
            %v1398 = vmul.f32 %v1256, %v1365
            %v1399 = vmul.f32 %v1261, %v1370
            %v1400 = vmul.f32 %v1264, %v1375
            %v1401 = vmul.f32 %v1269, %v1380
            %v1402 = vmul.f32 %v1272, %v1385
            %v1403 = vadd.f32 %v1275, %v1387
            %v1404 = vadd.f32 %v1276, %v1388
            %v1405 = vadd.f32 %v1277, %v1389
            %v1406 = vadd.f32 %v1278, %v1390
            %v1407 = vadd.f32 %v1279, %v1391
            %v1408 = vadd.f32 %v1280, %v1392
            %v1409 = vadd.f32 %v1281, %v1393
            %v1410 = vadd.f32 %v1282, %v1394
            %v1411 = vadd.f32 %v1283, %v1395
            %v1412 = vadd.f32 %v1284, %v1396
            %v1413 = vadd.f32 %v1285, %v1397
            %v1414 = vadd.f32 %v1286, %v1398
            %v1415 = vadd.f32 %v1287, %v1399
            %v1416 = vadd.f32 %v1288, %v1400
            %v1417 = vadd.f32 %v1289, %v1401
            %v1418 = vadd.f32 %v1290, %v1402
            %1419 = vst [vmem:[%s497] sm:$0xff] %v1403
            %1420 = vst [vmem:[%s497 + $0x8] sm:$0xff] %v1404
            %1421 = vst [vmem:[%s497 + $0x10] sm:$0xff] %v1405
            %1422 = vst [vmem:[%s497 + $0x18] sm:$0xff] %v1406
            %1423 = vst [vmem:[%s497 + $0x20] sm:$0xff] %v1407
            %1424 = vst [vmem:[%s497 + $0x28] sm:$0xff] %v1408
            %1425 = vst [vmem:[%s497 + $0x30] sm:$0xff] %v1409
            %1426 = vst [vmem:[%s497 + $0x38] sm:$0xff] %v1410
            %1427 = vst [vmem:[%s497 + $0x40] sm:$0xff] %v1411
            %1428 = vst [vmem:[%s497 + $0x48] sm:$0xff] %v1412
            %1429 = vst [vmem:[%s497 + $0x50] sm:$0xff] %v1413
            %1430 = vst [vmem:[%s497 + $0x58] sm:$0xff] %v1414
            %1431 = vst [vmem:[%s497 + $0x60] sm:$0xff] %v1415
            %1432 = vst [vmem:[%s497 + $0x68] sm:$0xff] %v1416
            %1433 = vst [vmem:[%s497 + $0x70] sm:$0xff] %v1417
            %1434 = vst [vmem:[%s497 + $0x78] sm:$0xff] %v1418
          $region84: #{tpu_custom_call.1} parent=79 // pred_fallthru
            _
          // Predicated region
          $region85: #{tpu_custom_call.1} parent=79 // pred_check
            %p1435 = pneg %p515
          $region86: #{tpu_custom_call.1} parent=79 // pred_check_branch
            %1437 = sbr.rel (%p1435) target = $region88
          $region87: #{tpu_custom_call.1} parent=79 // pred_region
            %v1438 = vld [vmem:[%s497] sm:$0xff]
            %v1439 = vld [vmem:[%s497 + $0x8] sm:$0xff]
            %v1440 = vld [vmem:[%s497 + $0x10] sm:$0xff]
            %v1441 = vld [vmem:[%s497 + $0x18] sm:$0xff]
            %v1442 = vld [vmem:[%s497 + $0x20] sm:$0xff]
            %v1443 = vld [vmem:[%s497 + $0x28] sm:$0xff]
            %v1444 = vld [vmem:[%s497 + $0x30] sm:$0xff]
            %v1445 = vld [vmem:[%s497 + $0x38] sm:$0xff]
            %v1446 = vld [vmem:[%s497 + $0x40] sm:$0xff]
            %v1447 = vld [vmem:[%s497 + $0x48] sm:$0xff]
            %v1448 = vld [vmem:[%s497 + $0x50] sm:$0xff]
            %v1449 = vld [vmem:[%s497 + $0x58] sm:$0xff]
            %v1450 = vld [vmem:[%s497 + $0x60] sm:$0xff]
            %v1451 = vld [vmem:[%s497 + $0x68] sm:$0xff]
            %v1452 = vld [vmem:[%s497 + $0x70] sm:$0xff]
            %v1453 = vld [vmem:[%s497 + $0x78] sm:$0xff]
            %v1454 = vmax.f32 %v1438, 0.0
            %v1455 = vmax.f32 %v1439, 0.0
            %v1456 = vmax.f32 %v1440, 0.0
            %v1457 = vmax.f32 %v1441, 0.0
            %v1458 = vmax.f32 %v1442, 0.0
            %v1459 = vmax.f32 %v1443, 0.0
            %v1460 = vmax.f32 %v1444, 0.0
            %v1461 = vmax.f32 %v1445, 0.0
            %v1462 = vmax.f32 %v1446, 0.0
            %v1463 = vmax.f32 %v1447, 0.0
            %v1464 = vmax.f32 %v1448, 0.0
            %v1465 = vmax.f32 %v1449, 0.0
            %v1466 = vmax.f32 %v1450, 0.0
            %v1467 = vmax.f32 %v1451, 0.0
            %v1468 = vmax.f32 %v1452, 0.0
            %v1469 = vmax.f32 %v1453, 0.0
            %1470 = vst [vmem:[%s497] sm:$0xff] %v1454
            %1471 = vst [vmem:[%s497 + $0x8] sm:$0xff] %v1455
            %1472 = vst [vmem:[%s497 + $0x10] sm:$0xff] %v1456
            %1473 = vst [vmem:[%s497 + $0x18] sm:$0xff] %v1457
            %1474 = vst [vmem:[%s497 + $0x20] sm:$0xff] %v1458
            %1475 = vst [vmem:[%s497 + $0x28] sm:$0xff] %v1459
            %1476 = vst [vmem:[%s497 + $0x30] sm:$0xff] %v1460
            %1477 = vst [vmem:[%s497 + $0x38] sm:$0xff] %v1461
            %1478 = vst [vmem:[%s497 + $0x40] sm:$0xff] %v1462
            %1479 = vst [vmem:[%s497 + $0x48] sm:$0xff] %v1463
            %1480 = vst [vmem:[%s497 + $0x50] sm:$0xff] %v1464
            %1481 = vst [vmem:[%s497 + $0x58] sm:$0xff] %v1465
            %1482 = vst [vmem:[%s497 + $0x60] sm:$0xff] %v1466
            %1483 = vst [vmem:[%s497 + $0x68] sm:$0xff] %v1467
            %1484 = vst [vmem:[%s497 + $0x70] sm:$0xff] %v1468
            %1485 = vst [vmem:[%s497 + $0x78] sm:$0xff] %v1469
          $region88: #{tpu_custom_call.1} parent=79 // pred_fallthru
            _
        $region80: #{tpu_custom_call.1} parent=43 // pred_fallthru
          _
        %s1486 = sand.u32 %s265, 1
        %s1487 = scalar_lea.sflag [#allocation13], %s1486
        %s1488 = sand.u32 %s265, 1
        %s1489 = smul.addr %s1488, 128
        %s1490 = scalar_lea.vmem [#allocation20], %s1489
        // Predicated region
        $region89: #{tpu_custom_call.1} parent=43 // pred_check
          %p1491 = pneg %p275
        $region90: #{tpu_custom_call.1} parent=43 // pred_check_branch
          %1493 = sbr.rel (%p1491) target = $region92
        $region91: #{tpu_custom_call.1} parent=43 // pred_region
          %s1494 = sld [smem:[#allocation6 + %s70]]
          %s1495 = smul.u32 16, %s69
          %s1497 = ssub.s32 2048, 2048
          %1498 = vsyncadd %s1487, %s1497
          %s1499 = smul.addr %s1494, 16
          %s1500 = sadd.s32 %s1495, %s1499
          %s1501 = smul.addr %s1500, 128
          %s1502 = scalar_lea.hbm %s13, %s1501
          %s1503 = sshll.u32 %s1490, 4
          %s1504 = int_to_ptr.vmem [resolvable:$true] %s1503
          %1509 = dma.vmem_to_hbm [thread:$0]  %s1504, 2048, %s1502, %s1487, 128, 128, 8
        $region92: #{tpu_custom_call.1} parent=43 // pred_fallthru
          _
      $region44: #{tpu_custom_call.1} parent=5 // pred_fallthru
        _
      %p1510 = scmp.le.s32.totalorder 2, %s59
      // Predicated region
      $region93: #{tpu_custom_call.1} parent=5 // pred_check
        %p1511 = pneg %p1510
      $region94: #{tpu_custom_call.1} parent=5 // pred_check_branch
        %1513 = sbr.rel (%p1511) target = $region96
      $region95: #{tpu_custom_call.1} parent=5 // pred_region
        %s1514 = ssub.s32 %s59, 2
        // Predicated region
        $region97: #{tpu_custom_call.1} parent=95 // pred_check
          %p1515 = pneg %p281
        $region98: #{tpu_custom_call.1} parent=95 // pred_check_branch
          %1517 = sbr.rel (%p1515) target = $region100
        $region99: #{tpu_custom_call.1} parent=95 // pred_region
          %s1518 = sand.u32 %s266, 1
          %s1519 = scalar_lea.sflag [#allocation13], %s1518
          %s1520 = sand.u32 %s266, 1
          %s1521 = smul.addr %s1520, 128
          %s1522 = scalar_lea.vmem [#allocation20], %s1521
          %1523 = dma.done %s1519, 2048
        $region100: #{tpu_custom_call.1} parent=95 // pred_fallthru
          _
      $region96: #{tpu_custom_call.1} parent=5 // pred_fallthru
        _
    $region6: #{tpu_custom_call.1} parent=1 // loop_footer
      %s63 = sadd.s32 1, %s59
    $region7: #{tpu_custom_call.1} parent=1 // loop_footer_branch
      %58 = sbr.rel target = $region3
    $region8: #{tpu_custom_call.1} parent=1 // loop_exit
      _
    %1524 = vsyncpa [#allocation12], 1
    %s1525 = scalar_lea.sflag [#allocation12], 1
    %1526 = vsyncpa %s1525, 1
    %1527 = vsyncpa [#allocation15], 1
    %s1528 = scalar_lea.sflag [#allocation15], 1
    %1529 = vsyncpa %s1528, 1
    %1530 = vsyncpa [#allocation18], 1
    %s1531 = scalar_lea.sflag [#allocation18], 1
    %1532 = vsyncpa %s1531, 1
    %1533 = vsyncpa [#allocation13], 1
    %s1534 = scalar_lea.sflag [#allocation13], 1
    %1535 = vsyncpa %s1534, 1

</llo_original>
